<compile_context>
chip_gen: v7x
topology: tpu7x:2x2x1
jax: 0.10.0
libtpu: 0.0.40
codegen_flags: <defaults>
</compile_context>

<pallas_src>
import numpy as np
import jax
import jax.numpy as jnp
from jax.experimental import pallas as pl
from jax.experimental.pallas import tpu as pltpu


# ----------------------------------------------------------------------------
# Constant 0/1 placement matrices (built once on host; tiny, MXU-consumed)
# ----------------------------------------------------------------------------
def _place_pad_matrix(H, W):
    """(H*W, (H+2)*(W+2)+2): place an unpadded HxW map into the interior of a
    zero-padded, flattened (H+2)x(W+2) buffer (+2 tail cols for tap overrun)."""
    Lbuf = (H + 2) * (W + 2) + 2
    M = np.zeros((H * W, Lbuf), np.float32)
    for y in range(H):
        for x in range(W):
            M[y * W + x, (y + 1) * (W + 2) + (x + 1)] = 1.0
    return jnp.asarray(M)


def _up2_place_matrix(H, W):
    """(H*(W+2), (2H+2)*(2W+2)+2): take conv-output layout (H rows of W+2, last
    2 cols of each row are halo garbage), nearest-upsample x2 and place into the
    interior of the NEXT stage's zero-padded flattened buffer."""
    Ho, Wo = 2 * H, 2 * W
    Lbuf = (Ho + 2) * (Wo + 2) + 2
    M = np.zeros((H * (W + 2), Lbuf), np.float32)
    for y in range(H):
        for x in range(W):                     # garbage cols x=W,W+1 stay zero
            g = y * (W + 2) + x
            for oy in range(2):
                for ox in range(2):
                    M[g, (2 * y + oy + 1) * (Wo + 2) + (2 * x + ox + 1)] = 1.0
    return jnp.asarray(M)


def _extract_valid_matrix(H, W):
    """(H*(W+2), H*W): drop the 2 garbage cols per row of conv-output layout."""
    M = np.zeros((H * (W + 2), H * W), np.float32)
    for y in range(H):
        for x in range(W):
            M[y * (W + 2) + x, y * W + x] = 1.0
    return jnp.asarray(M)


# ----------------------------------------------------------------------------
# Parameters (PyTorch-like layouts: conv w = OIHW, bias = (O,))
# ----------------------------------------------------------------------------
def init_decoder_params(key, in_ch, out_ch):
    assert len(in_ch) == len(out_ch)
    params = {"blocks": []}
    for i in range(len(in_ch)):
        key, kw, kb = jax.random.split(key, 3)
        w = 0.1 * jax.random.normal(kw, (out_ch[i], in_ch[i], 3, 3), jnp.float32)
        b = 0.1 * jax.random.normal(kb, (out_ch[i],), jnp.float32)
        params["blocks"].append((w, b))
    key, kf = jax.random.split(key)
    # final nn.Conv2d(out_ch[-1], 1, 1, 1, 0, bias=False), OIHW
    params["final_w"] = 0.1 * jax.random.normal(kf, (1, out_ch[-1], 1, 1), jnp.float32)
    return params


# ----------------------------------------------------------------------------
# Fused decoder forward (single pallas_call, grid over batch)
# ----------------------------------------------------------------------------
def decoder_forward(params, x_nchw, skips_nchw):
    """Mirrors Decoder.forward: cat on channels, block (conv3x3+ReLU[+up x2]),
    ..., final bias-free 1x1 conv.  Inputs/outputs are NCHW."""
    B, C0, H0, W0 = x_nchw.shape
    blocks = params["blocks"]
    n = len(blocks)
    skips_used = [skips_nchw[-(i + 1)] for i in range(n)]

    # Static per-block config
    Hs, Ws = [H0], [W0]
    for _ in range(n - 1):
        Hs.append(Hs[-1] * 2)
        Ws.append(Ws[-1] * 2)
    Cout = [int(w.shape[0]) for (w, _) in blocks]
    Cin = [int(w.shape[1]) for (w, _) in blocks]
    Cx = [C0] + Cout[:-1]                      # channels carried from previous stage
    Cs = [Cin[i] - Cx[i] for i in range(n)]    # skip channels per block
    for i in range(n):
        assert skips_used[i].shape == (B, Cs[i], Hs[i], Ws[i]), skips_used[i].shape

    Lbuf = [(Hs[i] + 2) * (Ws[i] + 2) + 2 for i in range(n)]   # padded, flattened (+2 tail)
    Lconv = [Hs[i] * (Ws[i] + 2) for i in range(n)]            # conv-output layout length
    HW_last = Hs[-1] * Ws[-1]

    # --- host-side, HBM-free prep (trailing-dim reshapes / tiny weight repacks) ---
    x_flat = x_nchw.reshape(B, C0, H0 * W0)
    skips_flat = [skips_used[i].reshape(B, Cs[i], Hs[i] * Ws[i]) for i in range(n)]
    # OIHW -> (Cout, 9*Cin) with rows ordered (tap t=dy*3+dx, then in-channel)
    w_flat = [jnp.transpose(w, (0, 2, 3, 1)).reshape(Cout[i], 9 * Cin[i])
              for i, (w, _) in enumerate(blocks)]
    b_col = [b.reshape(Cout[i], 1) for i, (_, b) in enumerate(blocks)]
    wf = params["final_w"].reshape(1, Cout[-1])

    P = [_place_pad_matrix(Hs[i], Ws[i]) for i in range(n)]          # skip/x placement
    S = [_up2_place_matrix(Hs[i], Ws[i]) for i in range(n - 1)]      # up x2 + re-pad
    E = _extract_valid_matrix(Hs[-1], Ws[-1])                        # drop halo cols

    # ------------------------------- kernel ----------------------------------
    def kernel(*refs):
        it = iter(refs)
        x_r = next(it)
        s_r = [next(it) for _ in range(n)]
        w_r = [next(it) for _ in range(n)]
        b_r = [next(it) for _ in range(n)]
        wf_r = next(it)
        P_r = [next(it) for _ in range(n)]
        S_r = [next(it) for _ in range(n - 1)]
        E_r = next(it)
        o_r = next(it)
        A_r = [next(it) for _ in range(n)]       # padded activation buffers
        slab_r = [next(it) for _ in range(n)]    # im2col slabs

        f32 = jnp.float32
        # Stage-0 buffer: halo-pad x and the first skip (channel concat == row ranges).
        A_r[0][0:Cx[0], :] = jnp.dot(x_r[0], P_r[0][...], preferred_element_type=f32)
        A_r[0][Cx[0]:Cin[0], :] = jnp.dot(s_r[0][0], P_r[0][...], preferred_element_type=f32)

        for i in range(n):
            Wp = Ws[i] + 2
            ci, co, lc = Cin[i], Cout[i], Lconv[i]
            # im2col: 9 contiguous shifted views of the padded, flattened buffer.
            for dy in range(3):
                for dx in range(3):
                    t = dy * 3 + dx
                    s0 = dy * Wp + dx
                    slab_r[i][t * ci:(t + 1) * ci, :] = A_r[i][:, s0:s0 + lc]
            # conv3x3 + bias + ReLU: one MXU matmul, lane-dense output.
            h = jnp.dot(w_r[i][...], slab_r[i][...], preferred_element_type=f32)
            h = jnp.maximum(h + b_r[i][...], 0.0)          # (Cout, H*(W+2))
            if i < n - 1:
                # fused nearest-x2 upsample + halo pad into next stage buffer,
                # plus next skip placement (channel concat again via row ranges).
                A_r[i + 1][0:co, :] = jnp.dot(h, S_r[i][...], preferred_element_type=f32)
                A_r[i + 1][co:Cin[i + 1], :] = jnp.dot(
                    s_r[i + 1][0], P_r[i + 1][...], preferred_element_type=f32)
            else:
                # final 1x1 conv (no bias), then drop halo garbage columns.
                y = jnp.dot(wf_r[...], h, preferred_element_type=f32)     # (1, Lconv)
                o_r[0] = jnp.dot(y, E_r[...], preferred_element_type=f32)  # (1, H*W)

    # ------------------------------ specs ------------------------------------
    def batched(c, l):
        return pl.BlockSpec((1, c, l), lambda b: (b, 0, 0))

    def const2d(a):
        return pl.BlockSpec(a.shape, lambda b: (0, 0))   # resident across grid steps

    in_specs = ([batched(C0, H0 * W0)]
                + [batched(Cs[i], Hs[i] * Ws[i]) for i in range(n)]
                + [const2d(a) for a in w_flat]
                + [const2d(a) for a in b_col]
                + [const2d(wf)]
                + [const2d(a) for a in P]
                + [const2d(a) for a in S]
                + [const2d(E)])

    scratch = ([pltpu.VMEM((Cin[i], Lbuf[i]), jnp.float32) for i in range(n)]
               + [pltpu.VMEM((9 * Cin[i], Lconv[i]), jnp.float32) for i in range(n)])

    out_flat = pl.pallas_call(
        kernel,
        out_shape=jax.ShapeDtypeStruct((B, 1, HW_last), jnp.float32),
        grid=(B,),
        in_specs=in_specs,
        out_specs=pl.BlockSpec((1, 1, HW_last), lambda b: (b, 0, 0)),
        scratch_shapes=scratch,
        compiler_params=pltpu.CompilerParams(dimension_semantics=("parallel",)),
    )(x_flat, *skips_flat, *w_flat, *b_col, wf, *P, *S, E)

    return out_flat.reshape(B, 1, Hs[-1], Ws[-1])


# ----------------------------------------------------------------------------
# Pure-JAX reference (for correctness check)
# ----------------------------------------------------------------------------
def _reference_forward(params, x, skips):
    n = len(params["blocks"])
    for i in range(n):
        x = jnp.concatenate([x, skips[-(i + 1)]], axis=1)
        w, b = params["blocks"][i]
        x = jax.lax.conv_general_dilated(
            x, w, window_strides=(1, 1), padding=((1, 1), (1, 1)),
            dimension_numbers=("NCHW", "OIHW", "NCHW"))
        x = jax.nn.relu(x + b.reshape(1, -1, 1, 1))
        if i != n - 1:
            x = jnp.repeat(jnp.repeat(x, 2, axis=2), 2, axis=3)
    x = jax.lax.conv_general_dilated(
        x, params["final_w"], window_strides=(1, 1), padding="VALID",
        dimension_numbers=("NCHW", "OIHW", "NCHW"))
    return x


# ----------------------------------------------------------------------------
# Demo
# ----------------------------------------------------------------------------
if __name__ == "__main__":
    key = jax.random.PRNGKey(0)
    B = 2

    # Two decoder blocks:
    #   step 0: x(B,4,8,8)   cat skips[-1](B,4,8,8)   -> in 8,  out 8, resize -> 16x16
    #   step 1: x(B,8,16,16) cat skips[-2](B,4,16,16) -> in 12, out 4, no resize
    #   final 1x1 conv: (B,4,16,16) -> (B,1,16,16)
    in_ch = [8, 12]
    out_ch = [8, 4]

    key, kx, ks0, ks1 = jax.random.split(key, 4)
    x = jax.random.normal(kx, (B, 4, 8, 8), jnp.float32)
    skips = [
        jax.random.normal(ks0, (B, 4, 16, 16), jnp.float32),  # used second (skips[-2])
        jax.random.normal(ks1, (B, 4, 8, 8), jnp.float32),    # used first  (skips[-1])
    ]

    params = init_decoder_params(jax.random.PRNGKey(42), in_ch, out_ch)

    out = decoder_forward(params, x, skips)
    out = jax.block_until_ready(out)
    assert out.shape == (B, 1, 16, 16), out.shape
    assert bool(jnp.all(jnp.isfinite(out)))

    ref = jax.block_until_ready(_reference_forward(params, x, skips))
    assert bool(jnp.allclose(out, ref, rtol=2e-2, atol=2e-2)), (
        float(jnp.max(jnp.abs(out - ref))))

    print("KERNEL_OK")
</pallas_src>

<mosaic_0001>
module attributes {stable_mosaic.version = 11 : i64} {
  func.func @kernel(%arg0: i32, %arg1: memref<1x4x64xf32, #tpu.memory_space<vmem>>, %arg2: memref<1x4x64xf32, #tpu.memory_space<vmem>>, %arg3: memref<1x4x256xf32, #tpu.memory_space<vmem>>, %arg4: memref<8x72xf32, #tpu.memory_space<vmem>>, %arg5: memref<4x108xf32, #tpu.memory_space<vmem>>, %arg6: memref<8x1xf32, #tpu.memory_space<vmem>>, %arg7: memref<4x1xf32, #tpu.memory_space<vmem>>, %arg8: memref<1x4xf32, #tpu.memory_space<vmem>>, %arg9: memref<64x102xf32, #tpu.memory_space<vmem>>, %arg10: memref<256x326xf32, #tpu.memory_space<vmem>>, %arg11: memref<80x326xf32, #tpu.memory_space<vmem>>, %arg12: memref<288x256xf32, #tpu.memory_space<vmem>>, %arg13: memref<1x1x256xf32, #tpu.memory_space<vmem>>, %arg14: memref<8x102xf32, #tpu.memory_space<vmem>>, %arg15: memref<12x326xf32, #tpu.memory_space<vmem>>, %arg16: memref<72x80xf32, #tpu.memory_space<vmem>>, %arg17: memref<108x288xf32, #tpu.memory_space<vmem>>) attributes {dimension_semantics = [#tpu.dimension_semantics<parallel>], iteration_bounds = array<i64: 2>, scalar_prefetch = 0 : i64, scratch_operands = 4 : i64, tpu.core_type = #tpu.core_type<tc>, window_params = [{transform_indices = @transform_0, window_bounds = array<i64: 1, 4, 64>}, {transform_indices = @transform_1, window_bounds = array<i64: 1, 4, 64>}, {transform_indices = @transform_2, window_bounds = array<i64: 1, 4, 256>}, {pipeline_mode = #tpu.pipeline_mode<synchronous>, transform_indices = @transform_3, window_bounds = array<i64: 8, 72>}, {pipeline_mode = #tpu.pipeline_mode<synchronous>, transform_indices = @transform_4, window_bounds = array<i64: 4, 108>}, {pipeline_mode = #tpu.pipeline_mode<synchronous>, transform_indices = @transform_5, window_bounds = array<i64: 8, 1>}, {pipeline_mode = #tpu.pipeline_mode<synchronous>, transform_indices = @transform_6, window_bounds = array<i64: 4, 1>}, {pipeline_mode = #tpu.pipeline_mode<synchronous>, transform_indices = @transform_7, window_bounds = array<i64: 1, 4>}, {pipeline_mode = #tpu.pipeline_mode<synchronous>, transform_indices = @transform_8, window_bounds = array<i64: 64, 102>}, {pipeline_mode = #tpu.pipeline_mode<synchronous>, transform_indices = @transform_9, window_bounds = array<i64: 256, 326>}, {pipeline_mode = #tpu.pipeline_mode<synchronous>, transform_indices = @transform_10, window_bounds = array<i64: 80, 326>}, {pipeline_mode = #tpu.pipeline_mode<synchronous>, transform_indices = @transform_11, window_bounds = array<i64: 288, 256>}, {transform_indices = @transform_12, window_bounds = array<i64: 1, 1, 256>}]} {
    %c0 = arith.constant 0 : index
    %c0_0 = arith.constant 0 : index
    %c0_1 = arith.constant 0 : index
    %0 = vector.load %arg1[%c0, %c0_0, %c0_1] : memref<1x4x64xf32, #tpu.memory_space<vmem>>, vector<1x4x64xf32>
    %1 = vector.shape_cast %0 : vector<1x4x64xf32> to vector<4x64xf32>
    %c0_2 = arith.constant 0 : index
    %c0_3 = arith.constant 0 : index
    %2 = vector.load %arg9[%c0_2, %c0_3] : memref<64x102xf32, #tpu.memory_space<vmem>>, vector<64x102xf32>
    %cst = arith.constant dense<0.000000e+00> : vector<4x102xf32>
    %3 = tpu.matmul %1, %2, %cst {dimension_numbers = #tpu.dot_dimension_numbers<[1], [0], [0], [1], [0, 0, 1, 1], [], []>} : vector<4x64xf32>, vector<64x102xf32>, vector<4x102xf32> -> vector<4x102xf32>
    %c0_4 = arith.constant 0 : index
    %c0_5 = arith.constant 0 : index
    %4 = vector.load %arg14[%c0_4, %c0_5] : memref<8x102xf32, #tpu.memory_space<vmem>>, vector<4x102xf32>
    tpu.vector_store %arg14[%c0_4, %c0_5], %3 {strides = array<i32>} : memref<8x102xf32, #tpu.memory_space<vmem>>, vector<4x102xf32>,
    %c0_6 = arith.constant 0 : index
    %c0_7 = arith.constant 0 : index
    %c0_8 = arith.constant 0 : index
    %5 = vector.load %arg2[%c0_6, %c0_7, %c0_8] : memref<1x4x64xf32, #tpu.memory_space<vmem>>, vector<1x4x64xf32>
    %6 = vector.shape_cast %5 : vector<1x4x64xf32> to vector<4x64xf32>
    %c0_9 = arith.constant 0 : index
    %c0_10 = arith.constant 0 : index
    %7 = vector.load %arg9[%c0_9, %c0_10] : memref<64x102xf32, #tpu.memory_space<vmem>>, vector<64x102xf32>
    %cst_11 = arith.constant dense<0.000000e+00> : vector<4x102xf32>
    %8 = tpu.matmul %6, %7, %cst_11 {dimension_numbers = #tpu.dot_dimension_numbers<[1], [0], [0], [1], [0, 0, 1, 1], [], []>} : vector<4x64xf32>, vector<64x102xf32>, vector<4x102xf32> -> vector<4x102xf32>
    %c4 = arith.constant 4 : index
    %c0_12 = arith.constant 0 : index
    %9 = vector.load %arg14[%c4, %c0_12] : memref<8x102xf32, #tpu.memory_space<vmem>>, vector<4x102xf32>
    tpu.vector_store %arg14[%c4, %c0_12], %8 {strides = array<i32>} : memref<8x102xf32, #tpu.memory_space<vmem>>, vector<4x102xf32>,
    %c0_13 = arith.constant 0 : index
    %c0_14 = arith.constant 0 : index
    %10 = vector.load %arg14[%c0_13, %c0_14] : memref<8x102xf32, #tpu.memory_space<vmem>>, vector<8x80xf32>
    %c0_15 = arith.constant 0 : index
    %c0_16 = arith.constant 0 : index
    %11 = vector.load %arg16[%c0_15, %c0_16] : memref<72x80xf32, #tpu.memory_space<vmem>>, vector<8x80xf32>
    tpu.vector_store %arg16[%c0_15, %c0_16], %10 {strides = array<i32>} : memref<72x80xf32, #tpu.memory_space<vmem>>, vector<8x80xf32>,
    %c0_17 = arith.constant 0 : index
    %c1 = arith.constant 1 : index
    %12 = vector.load %arg14[%c0_17, %c1] : memref<8x102xf32, #tpu.memory_space<vmem>>, vector<8x80xf32>
    %c8 = arith.constant 8 : index
    %c0_18 = arith.constant 0 : index
    %13 = vector.load %arg16[%c8, %c0_18] : memref<72x80xf32, #tpu.memory_space<vmem>>, vector<8x80xf32>
    tpu.vector_store %arg16[%c8, %c0_18], %12 {strides = array<i32>} : memref<72x80xf32, #tpu.memory_space<vmem>>, vector<8x80xf32>,
    %c0_19 = arith.constant 0 : index
    %c2 = arith.constant 2 : index
    %14 = vector.load %arg14[%c0_19, %c2] : memref<8x102xf32, #tpu.memory_space<vmem>>, vector<8x80xf32>
    %c16 = arith.constant 16 : index
    %c0_20 = arith.constant 0 : index
    %15 = vector.load %arg16[%c16, %c0_20] : memref<72x80xf32, #tpu.memory_space<vmem>>, vector<8x80xf32>
    tpu.vector_store %arg16[%c16, %c0_20], %14 {strides = array<i32>} : memref<72x80xf32, #tpu.memory_space<vmem>>, vector<8x80xf32>,
    %c0_21 = arith.constant 0 : index
    %c10 = arith.constant 10 : index
    %16 = vector.load %arg14[%c0_21, %c10] : memref<8x102xf32, #tpu.memory_space<vmem>>, vector<8x80xf32>
    %c24 = arith.constant 24 : index
    %c0_22 = arith.constant 0 : index
    %17 = vector.load %arg16[%c24, %c0_22] : memref<72x80xf32, #tpu.memory_space<vmem>>, vector<8x80xf32>
    tpu.vector_store %arg16[%c24, %c0_22], %16 {strides = array<i32>} : memref<72x80xf32, #tpu.memory_space<vmem>>, vector<8x80xf32>,
    %c0_23 = arith.constant 0 : index
    %c11 = arith.constant 11 : index
    %18 = vector.load %arg14[%c0_23, %c11] : memref<8x102xf32, #tpu.memory_space<vmem>>, vector<8x80xf32>
    %c32 = arith.constant 32 : index
    %c0_24 = arith.constant 0 : index
    %19 = vector.load %arg16[%c32, %c0_24] : memref<72x80xf32, #tpu.memory_space<vmem>>, vector<8x80xf32>
    tpu.vector_store %arg16[%c32, %c0_24], %18 {strides = array<i32>} : memref<72x80xf32, #tpu.memory_space<vmem>>, vector<8x80xf32>,
    %c0_25 = arith.constant 0 : index
    %c12 = arith.constant 12 : index
    %20 = vector.load %arg14[%c0_25, %c12] : memref<8x102xf32, #tpu.memory_space<vmem>>, vector<8x80xf32>
    %c40 = arith.constant 40 : index
    %c0_26 = arith.constant 0 : index
    %21 = vector.load %arg16[%c40, %c0_26] : memref<72x80xf32, #tpu.memory_space<vmem>>, vector<8x80xf32>
    tpu.vector_store %arg16[%c40, %c0_26], %20 {strides = array<i32>} : memref<72x80xf32, #tpu.memory_space<vmem>>, vector<8x80xf32>,
    %c0_27 = arith.constant 0 : index
    %c20 = arith.constant 20 : index
    %22 = vector.load %arg14[%c0_27, %c20] : memref<8x102xf32, #tpu.memory_space<vmem>>, vector<8x80xf32>
    %c48 = arith.constant 48 : index
    %c0_28 = arith.constant 0 : index
    %23 = vector.load %arg16[%c48, %c0_28] : memref<72x80xf32, #tpu.memory_space<vmem>>, vector<8x80xf32>
    tpu.vector_store %arg16[%c48, %c0_28], %22 {strides = array<i32>} : memref<72x80xf32, #tpu.memory_space<vmem>>, vector<8x80xf32>,
    %c0_29 = arith.constant 0 : index
    %c21 = arith.constant 21 : index
    %24 = vector.load %arg14[%c0_29, %c21] : memref<8x102xf32, #tpu.memory_space<vmem>>, vector<8x80xf32>
    %c56 = arith.constant 56 : index
    %c0_30 = arith.constant 0 : index
    %25 = vector.load %arg16[%c56, %c0_30] : memref<72x80xf32, #tpu.memory_space<vmem>>, vector<8x80xf32>
    tpu.vector_store %arg16[%c56, %c0_30], %24 {strides = array<i32>} : memref<72x80xf32, #tpu.memory_space<vmem>>, vector<8x80xf32>,
    %c0_31 = arith.constant 0 : index
    %c22 = arith.constant 22 : index
    %26 = vector.load %arg14[%c0_31, %c22] : memref<8x102xf32, #tpu.memory_space<vmem>>, vector<8x80xf32>
    %c64 = arith.constant 64 : index
    %c0_32 = arith.constant 0 : index
    %27 = vector.load %arg16[%c64, %c0_32] : memref<72x80xf32, #tpu.memory_space<vmem>>, vector<8x80xf32>
    tpu.vector_store %arg16[%c64, %c0_32], %26 {strides = array<i32>} : memref<72x80xf32, #tpu.memory_space<vmem>>, vector<8x80xf32>,
    %c0_33 = arith.constant 0 : index
    %c0_34 = arith.constant 0 : index
    %28 = vector.load %arg4[%c0_33, %c0_34] : memref<8x72xf32, #tpu.memory_space<vmem>>, vector<8x72xf32>
    %c0_35 = arith.constant 0 : index
    %c0_36 = arith.constant 0 : index
    %29 = vector.load %arg16[%c0_35, %c0_36] : memref<72x80xf32, #tpu.memory_space<vmem>>, vector<72x80xf32>
    %cst_37 = arith.constant dense<0.000000e+00> : vector<8x80xf32>
    %30 = tpu.matmul %28, %29, %cst_37 {dimension_numbers = #tpu.dot_dimension_numbers<[1], [0], [0], [1], [0, 0, 1, 1], [], []>} : vector<8x72xf32>, vector<72x80xf32>, vector<8x80xf32> -> vector<8x80xf32>
    %c0_38 = arith.constant 0 : index
    %c0_39 = arith.constant 0 : index
    %31 = vector.load %arg6[%c0_38, %c0_39] : memref<8x1xf32, #tpu.memory_space<vmem>>, vector<8x1xf32>
    %32 = vector.broadcast %31 : vector<8x1xf32> to vector<8x80xf32>
    %33 = arith.addf %30, %32 : vector<8x80xf32>
    %cst_40 = arith.constant 0.000000e+00 : f32
    %34 = vector.broadcast %cst_40 : f32 to vector<8x80xf32>
    %35 = arith.maximumf %33, %34 : vector<8x80xf32>
    %c0_41 = arith.constant 0 : index
    %c0_42 = arith.constant 0 : index
    %36 = vector.load %arg11[%c0_41, %c0_42] : memref<80x326xf32, #tpu.memory_space<vmem>>, vector<80x326xf32>
    %cst_43 = arith.constant dense<0.000000e+00> : vector<8x326xf32>
    %37 = tpu.matmul %35, %36, %cst_43 {dimension_numbers = #tpu.dot_dimension_numbers<[1], [0], [0], [1], [0, 0, 1, 1], [], []>} : vector<8x80xf32>, vector<80x326xf32>, vector<8x326xf32> -> vector<8x326xf32>
    %c0_44 = arith.constant 0 : index
    %c0_45 = arith.constant 0 : index
    %38 = vector.load %arg15[%c0_44, %c0_45] : memref<12x326xf32, #tpu.memory_space<vmem>>, vector<8x326xf32>
    tpu.vector_store %arg15[%c0_44, %c0_45], %37 {strides = array<i32>} : memref<12x326xf32, #tpu.memory_space<vmem>>, vector<8x326xf32>,
    %c0_46 = arith.constant 0 : index
    %c0_47 = arith.constant 0 : index
    %c0_48 = arith.constant 0 : index
    %39 = vector.load %arg3[%c0_46, %c0_47, %c0_48] : memref<1x4x256xf32, #tpu.memory_space<vmem>>, vector<1x4x256xf32>
    %40 = vector.shape_cast %39 : vector<1x4x256xf32> to vector<4x256xf32>
    %c0_49 = arith.constant 0 : index
    %c0_50 = arith.constant 0 : index
    %41 = vector.load %arg10[%c0_49, %c0_50] : memref<256x326xf32, #tpu.memory_space<vmem>>, vector<256x326xf32>
    %cst_51 = arith.constant dense<0.000000e+00> : vector<4x326xf32>
    %42 = tpu.matmul %40, %41, %cst_51 {dimension_numbers = #tpu.dot_dimension_numbers<[1], [0], [0], [1], [0, 0, 1, 1], [], []>} : vector<4x256xf32>, vector<256x326xf32>, vector<4x326xf32> -> vector<4x326xf32>
    %c8_52 = arith.constant 8 : index
    %c0_53 = arith.constant 0 : index
    %43 = vector.load %arg15[%c8_52, %c0_53] : memref<12x326xf32, #tpu.memory_space<vmem>>, vector<4x326xf32>
    tpu.vector_store %arg15[%c8_52, %c0_53], %42 {strides = array<i32>} : memref<12x326xf32, #tpu.memory_space<vmem>>, vector<4x326xf32>,
    %c0_54 = arith.constant 0 : index
    %c0_55 = arith.constant 0 : index
    %44 = vector.load %arg15[%c0_54, %c0_55] : memref<12x326xf32, #tpu.memory_space<vmem>>, vector<12x288xf32>
    %c0_56 = arith.constant 0 : index
    %c0_57 = arith.constant 0 : index
    %45 = vector.load %arg17[%c0_56, %c0_57] : memref<108x288xf32, #tpu.memory_space<vmem>>, vector<12x288xf32>
    tpu.vector_store %arg17[%c0_56, %c0_57], %44 {strides = array<i32>} : memref<108x288xf32, #tpu.memory_space<vmem>>, vector<12x288xf32>,
    %c0_58 = arith.constant 0 : index
    %c1_59 = arith.constant 1 : index
    %46 = vector.load %arg15[%c0_58, %c1_59] : memref<12x326xf32, #tpu.memory_space<vmem>>, vector<12x288xf32>
    %c12_60 = arith.constant 12 : index
    %c0_61 = arith.constant 0 : index
    %47 = vector.load %arg17[%c12_60, %c0_61] : memref<108x288xf32, #tpu.memory_space<vmem>>, vector<12x288xf32>
    tpu.vector_store %arg17[%c12_60, %c0_61], %46 {strides = array<i32>} : memref<108x288xf32, #tpu.memory_space<vmem>>, vector<12x288xf32>,
    %c0_62 = arith.constant 0 : index
    %c2_63 = arith.constant 2 : index
    %48 = vector.load %arg15[%c0_62, %c2_63] : memref<12x326xf32, #tpu.memory_space<vmem>>, vector<12x288xf32>
    %c24_64 = arith.constant 24 : index
    %c0_65 = arith.constant 0 : index
    %49 = vector.load %arg17[%c24_64, %c0_65] : memref<108x288xf32, #tpu.memory_space<vmem>>, vector<12x288xf32>
    tpu.vector_store %arg17[%c24_64, %c0_65], %48 {strides = array<i32>} : memref<108x288xf32, #tpu.memory_space<vmem>>, vector<12x288xf32>,
    %c0_66 = arith.constant 0 : index
    %c18 = arith.constant 18 : index
    %50 = vector.load %arg15[%c0_66, %c18] : memref<12x326xf32, #tpu.memory_space<vmem>>, vector<12x288xf32>
    %c36 = arith.constant 36 : index
    %c0_67 = arith.constant 0 : index
    %51 = vector.load %arg17[%c36, %c0_67] : memref<108x288xf32, #tpu.memory_space<vmem>>, vector<12x288xf32>
    tpu.vector_store %arg17[%c36, %c0_67], %50 {strides = array<i32>} : memref<108x288xf32, #tpu.memory_space<vmem>>, vector<12x288xf32>,
    %c0_68 = arith.constant 0 : index
    %c19 = arith.constant 19 : index
    %52 = vector.load %arg15[%c0_68, %c19] : memref<12x326xf32, #tpu.memory_space<vmem>>, vector<12x288xf32>
    %c48_69 = arith.constant 48 : index
    %c0_70 = arith.constant 0 : index
    %53 = vector.load %arg17[%c48_69, %c0_70] : memref<108x288xf32, #tpu.memory_space<vmem>>, vector<12x288xf32>
    tpu.vector_store %arg17[%c48_69, %c0_70], %52 {strides = array<i32>} : memref<108x288xf32, #tpu.memory_space<vmem>>, vector<12x288xf32>,
    %c0_71 = arith.constant 0 : index
    %c20_72 = arith.constant 20 : index
    %54 = vector.load %arg15[%c0_71, %c20_72] : memref<12x326xf32, #tpu.memory_space<vmem>>, vector<12x288xf32>
    %c60 = arith.constant 60 : index
    %c0_73 = arith.constant 0 : index
    %55 = vector.load %arg17[%c60, %c0_73] : memref<108x288xf32, #tpu.memory_space<vmem>>, vector<12x288xf32>
    tpu.vector_store %arg17[%c60, %c0_73], %54 {strides = array<i32>} : memref<108x288xf32, #tpu.memory_space<vmem>>, vector<12x288xf32>,
    %c0_74 = arith.constant 0 : index
    %c36_75 = arith.constant 36 : index
    %56 = vector.load %arg15[%c0_74, %c36_75] : memref<12x326xf32, #tpu.memory_space<vmem>>, vector<12x288xf32>
    %c72 = arith.constant 72 : index
    %c0_76 = arith.constant 0 : index
    %57 = vector.load %arg17[%c72, %c0_76] : memref<108x288xf32, #tpu.memory_space<vmem>>, vector<12x288xf32>
    tpu.vector_store %arg17[%c72, %c0_76], %56 {strides = array<i32>} : memref<108x288xf32, #tpu.memory_space<vmem>>, vector<12x288xf32>,
    %c0_77 = arith.constant 0 : index
    %c37 = arith.constant 37 : index
    %58 = vector.load %arg15[%c0_77, %c37] : memref<12x326xf32, #tpu.memory_space<vmem>>, vector<12x288xf32>
    %c84 = arith.constant 84 : index
    %c0_78 = arith.constant 0 : index
    %59 = vector.load %arg17[%c84, %c0_78] : memref<108x288xf32, #tpu.memory_space<vmem>>, vector<12x288xf32>
    tpu.vector_store %arg17[%c84, %c0_78], %58 {strides = array<i32>} : memref<108x288xf32, #tpu.memory_space<vmem>>, vector<12x288xf32>,
    %c0_79 = arith.constant 0 : index
    %c38 = arith.constant 38 : index
    %60 = vector.load %arg15[%c0_79, %c38] : memref<12x326xf32, #tpu.memory_space<vmem>>, vector<12x288xf32>
    %c96 = arith.constant 96 : index
    %c0_80 = arith.constant 0 : index
    %61 = vector.load %arg17[%c96, %c0_80] : memref<108x288xf32, #tpu.memory_space<vmem>>, vector<12x288xf32>
    tpu.vector_store %arg17[%c96, %c0_80], %60 {strides = array<i32>} : memref<108x288xf32, #tpu.memory_space<vmem>>, vector<12x288xf32>,
    %c0_81 = arith.constant 0 : index
    %c0_82 = arith.constant 0 : index
    %62 = vector.load %arg5[%c0_81, %c0_82] : memref<4x108xf32, #tpu.memory_space<vmem>>, vector<4x108xf32>
    %c0_83 = arith.constant 0 : index
    %c0_84 = arith.constant 0 : index
    %63 = vector.load %arg17[%c0_83, %c0_84] : memref<108x288xf32, #tpu.memory_space<vmem>>, vector<108x288xf32>
    %cst_85 = arith.constant dense<0.000000e+00> : vector<4x288xf32>
    %64 = tpu.matmul %62, %63, %cst_85 {dimension_numbers = #tpu.dot_dimension_numbers<[1], [0], [0], [1], [0, 0, 1, 1], [], []>} : vector<4x108xf32>, vector<108x288xf32>, vector<4x288xf32> -> vector<4x288xf32>
    %c0_86 = arith.constant 0 : index
    %c0_87 = arith.constant 0 : index
    %65 = vector.load %arg7[%c0_86, %c0_87] : memref<4x1xf32, #tpu.memory_space<vmem>>, vector<4x1xf32>
    %66 = vector.broadcast %65 : vector<4x1xf32> to vector<4x288xf32>
    %67 = arith.addf %64, %66 : vector<4x288xf32>
    %cst_88 = arith.constant 0.000000e+00 : f32
    %68 = vector.broadcast %cst_88 : f32 to vector<4x288xf32>
    %69 = arith.maximumf %67, %68 : vector<4x288xf32>
    %c0_89 = arith.constant 0 : index
    %c0_90 = arith.constant 0 : index
    %70 = vector.load %arg8[%c0_89, %c0_90] : memref<1x4xf32, #tpu.memory_space<vmem>>, vector<1x4xf32>
    %cst_91 = arith.constant dense<0.000000e+00> : vector<1x288xf32>
    %71 = tpu.matmul %70, %69, %cst_91 {dimension_numbers = #tpu.dot_dimension_numbers<[1], [0], [0], [1], [0, 0, 1, 1], [], []>} : vector<1x4xf32>, vector<4x288xf32>, vector<1x288xf32> -> vector<1x288xf32>
    %c0_92 = arith.constant 0 : index
    %c0_93 = arith.constant 0 : index
    %72 = vector.load %arg12[%c0_92, %c0_93] : memref<288x256xf32, #tpu.memory_space<vmem>>, vector<288x256xf32>
    %cst_94 = arith.constant dense<0.000000e+00> : vector<1x256xf32>
    %73 = tpu.matmul %71, %72, %cst_94 {dimension_numbers = #tpu.dot_dimension_numbers<[1], [0], [0], [1], [0, 0, 1, 1], [], []>} : vector<1x288xf32>, vector<288x256xf32>, vector<1x256xf32> -> vector<1x256xf32>
    %c0_95 = arith.constant 0 : index
    %c0_96 = arith.constant 0 : index
    %c0_97 = arith.constant 0 : index
    %74 = vector.load %arg13[%c0_95, %c0_96, %c0_97] : memref<1x1x256xf32, #tpu.memory_space<vmem>>, vector<1x1x256xf32>
    %75 = vector.shape_cast %74 : vector<1x1x256xf32> to vector<1x256xf32>
    %76 = vector.shape_cast %73 : vector<1x256xf32> to vector<1x1x256xf32>
    tpu.vector_store %arg13[%c0_95, %c0_96, %c0_97], %76 {strides = array<i32>} : memref<1x1x256xf32, #tpu.memory_space<vmem>>, vector<1x1x256xf32>,
    return
  }
  func.func @transform_0(%arg0: i32) -> (i32, i32, i32) {
    %c0_i32 = arith.constant 0 : i32
    %c0_i32_0 = arith.constant 0 : i32
    %c0_i32_1 = arith.constant 0 : i32
    return %arg0, %c0_i32, %c0_i32_0 : i32, i32, i32
  }
  func.func @transform_1(%arg0: i32) -> (i32, i32, i32) {
    %c0_i32 = arith.constant 0 : i32
    %c0_i32_0 = arith.constant 0 : i32
    %c0_i32_1 = arith.constant 0 : i32
    return %arg0, %c0_i32, %c0_i32_0 : i32, i32, i32
  }
  func.func @transform_2(%arg0: i32) -> (i32, i32, i32) {
    %c0_i32 = arith.constant 0 : i32
    %c0_i32_0 = arith.constant 0 : i32
    %c0_i32_1 = arith.constant 0 : i32
    return %arg0, %c0_i32, %c0_i32_0 : i32, i32, i32
  }
  func.func @transform_3(%arg0: i32) -> (i32, i32) {
    %c0_i32 = arith.constant 0 : i32
    %c0_i32_0 = arith.constant 0 : i32
    %c0_i32_1 = arith.constant 0 : i32
    return %c0_i32, %c0_i32_0 : i32, i32
  }
  func.func @transform_4(%arg0: i32) -> (i32, i32) {
    %c0_i32 = arith.constant 0 : i32
    %c0_i32_0 = arith.constant 0 : i32
    %c0_i32_1 = arith.constant 0 : i32
    return %c0_i32, %c0_i32_0 : i32, i32
  }
  func.func @transform_5(%arg0: i32) -> (i32, i32) {
    %c0_i32 = arith.constant 0 : i32
    %c0_i32_0 = arith.constant 0 : i32
    %c0_i32_1 = arith.constant 0 : i32
    return %c0_i32, %c0_i32_0 : i32, i32
  }
  func.func @transform_6(%arg0: i32) -> (i32, i32) {
    %c0_i32 = arith.constant 0 : i32
    %c0_i32_0 = arith.constant 0 : i32
    %c0_i32_1 = arith.constant 0 : i32
    return %c0_i32, %c0_i32_0 : i32, i32
  }
  func.func @transform_7(%arg0: i32) -> (i32, i32) {
    %c0_i32 = arith.constant 0 : i32
    %c0_i32_0 = arith.constant 0 : i32
    %c0_i32_1 = arith.constant 0 : i32
    return %c0_i32, %c0_i32_0 : i32, i32
  }
  func.func @transform_8(%arg0: i32) -> (i32, i32) {
    %c0_i32 = arith.constant 0 : i32
    %c0_i32_0 = arith.constant 0 : i32
    %c0_i32_1 = arith.constant 0 : i32
    return %c0_i32, %c0_i32_0 : i32, i32
  }
  func.func @transform_9(%arg0: i32) -> (i32, i32) {
    %c0_i32 = arith.constant 0 : i32
    %c0_i32_0 = arith.constant 0 : i32
    %c0_i32_1 = arith.constant 0 : i32
    return %c0_i32, %c0_i32_0 : i32, i32
  }
  func.func @transform_10(%arg0: i32) -> (i32, i32) {
    %c0_i32 = arith.constant 0 : i32
    %c0_i32_0 = arith.constant 0 : i32
    %c0_i32_1 = arith.constant 0 : i32
    return %c0_i32, %c0_i32_0 : i32, i32
  }
  func.func @transform_11(%arg0: i32) -> (i32, i32) {
    %c0_i32 = arith.constant 0 : i32
    %c0_i32_0 = arith.constant 0 : i32
    %c0_i32_1 = arith.constant 0 : i32
    return %c0_i32, %c0_i32_0 : i32, i32
  }
  func.func @transform_12(%arg0: i32) -> (i32, i32, i32) {
    %c0_i32 = arith.constant 0 : i32
    %c0_i32_0 = arith.constant 0 : i32
    %c0_i32_1 = arith.constant 0 : i32
    return %arg0, %c0_i32, %c0_i32_0 : i32, i32, i32
  }
}

</mosaic_0001>

<llo_original>
// kernel: tpu_custom_call.1
$region0: #{tpu_custom_call.1}
  #allocation0 [shape = 'u32[]', space=smem, size = 0x4, offset = 0x4, fixed_abs, tag = 'smem constant byte address 0x4 - core index']
  #allocation1 [shape = 'u32[144,128]{1,0:T(1,128)}', space=vmem, size = 0x12000, scoped, tag = 'internal scratch']
  #allocation2 [shape = 'f32[8,102]{1,0:T(8,128)}', space=vmem, size = 0x1000, scoped, tag = 'scratch operand']
  #allocation3 [shape = 'f32[12,326]{1,0:T(8,128)}', space=vmem, size = 0x6000, scoped, tag = 'scratch operand']
  #allocation4 [shape = 'f32[72,80]{1,0:T(8,128)}', space=vmem, size = 0x9000, scoped, tag = 'scratch operand']
  #allocation5 [shape = 'f32[108,288]{1,0:T(8,128)}', space=vmem, size = 0x2a000, scoped, tag = 'scratch operand']
  %s0 = inlined_call_operand.vmem [shape: f32[2,4,64], index: 0, kind: input, shape index: {}]
  %s1 = inlined_call_operand.vmem [shape: f32[2,4,64], index: 1, kind: input, shape index: {}]
  %s2 = inlined_call_operand.vmem [shape: f32[2,4,256], index: 2, kind: input, shape index: {}]
  %s3 = inlined_call_operand.vmem [shape: f32[8,72], index: 3, kind: input, shape index: {}]
  %s4 = inlined_call_operand.vmem [shape: f32[4,108], index: 4, kind: input, shape index: {}]
  %s5 = inlined_call_operand.vmem [shape: f32[8,1], index: 5, kind: input, shape index: {}]
  %s6 = inlined_call_operand.vmem [shape: f32[4,1], index: 6, kind: input, shape index: {}]
  %s7 = inlined_call_operand.vmem [shape: f32[1,4], index: 7, kind: input, shape index: {}]
  %s8 = inlined_call_operand.vmem [shape: f32[64,102], index: 8, kind: input, shape index: {}]
  %s9 = inlined_call_operand.vmem [shape: f32[256,326], index: 9, kind: input, shape index: {}]
  %s10 = inlined_call_operand.vmem [shape: f32[80,326], index: 10, kind: input, shape index: {}]
  %s11 = inlined_call_operand.vmem [shape: f32[288,256], index: 11, kind: input, shape index: {}]
  %s12 = inlined_call_operand.hbm [shape: f32[2,1,256], index: 12, kind: output, shape index: {}]
  %s13 = sld [smem:[#allocation0]]
  $region81: #{tpu_custom_call.1} parent=0
    _
  %s15 = ssub.s32 1, %s13
  %s16 = scalar_select 0, %s15, %s13
  $region1: #{tpu_custom_call.1} parent=0
    #allocation6 [shape = 'u8[2048]{0}', space=vmem, size = 0x800, scoped, tag = 'output window, operand 0']
    #allocation7 [shape = 's32[2]{0}', space=sflag, size = 0x8, scoped, tag = 'scoped memory for tpu_custom_call.1']
    %17 = vsyncpa [#allocation7], 0
    %s18 = scalar_lea.sflag [#allocation7], 1
    %19 = vsyncpa %s18, 0
    loop: start=0, step=1, limit=4
    $region2: #{tpu_custom_call.1} parent=1 // loop_pre_header
      _
    $region3: #{tpu_custom_call.1} parent=1 // loop_header
      %s21 = sphi 0, %s25
      %p22 = scmp.ge.s32.totalorder %s21, 4
      %s31 = sphi 0, %s33
      %s34 = sphi 0, %s31
      %s35 = sphi 0, %s34
      %s51 = sphi 0, %s35
      %s57 = sphi 0, %s59
      %s60 = sphi 0, %s57
      %s61 = sphi 0, %s60
      %s77 = sphi 0, %s61
      %s83 = sphi 0, %s85
      %s86 = sphi 0, %s83
      %s87 = sphi 0, %s86
      %s103 = sphi 0, %s87
      %s107 = sphi 0, %s107
      %s109 = sphi 0, %s107
      %s110 = sphi 0, %s109
      %s124 = sphi 0, %s110
      %s128 = sphi 0, %s128
      %s130 = sphi 0, %s128
      %s131 = sphi 0, %s130
      %s145 = sphi 0, %s131
      %s149 = sphi 0, %s149
      %s151 = sphi 0, %s149
      %s152 = sphi 0, %s151
      %s166 = sphi 0, %s152
      %s170 = sphi 0, %s170
      %s172 = sphi 0, %s170
      %s173 = sphi 0, %s172
      %s187 = sphi 0, %s173
      %s191 = sphi 0, %s191
      %s193 = sphi 0, %s191
      %s194 = sphi 0, %s193
      %s208 = sphi 0, %s194
      %s212 = sphi 0, %s212
      %s214 = sphi 0, %s212
      %s215 = sphi 0, %s214
      %s229 = sphi 0, %s215
      %s233 = sphi 0, %s233
      %s235 = sphi 0, %s233
      %s236 = sphi 0, %s235
      %s250 = sphi 0, %s236
      %s254 = sphi 0, %s254
      %s256 = sphi 0, %s254
      %s257 = sphi 0, %s256
      %s271 = sphi 0, %s257
      %s275 = sphi 0, %s275
      %s277 = sphi 0, %s275
      %s278 = sphi 0, %s277
      %s292 = sphi 0, %s278
      %s298 = sphi 0, %s300
      %s301 = sphi 0, %s298
      %s302 = sphi 0, %s301
      %s318 = sphi 0, %s302
    $region4: #{tpu_custom_call.1} parent=1 // loop_header_branch
      %24 = sbr.rel (%p22) target = $region8
    $region5: #{tpu_custom_call.1} parent=1 // loop_body
      %s26 = ssub.s32 %s21, 1
      %s27 = ssub.s32 %s21, 2
      %s28 = sadd.s32 %s21, 1
      %s29 = ssub.s32 %s21, %s28
      %p30 = scmp.eq.s32.totalorder %s29, 0
      %s32 = sadd.s32 %s31, 1
      %s33 = scalar_select %p30, %s31, %s32
      %p36 = pneg %p30
      %p37 = scmp.eq.s32.totalorder %s21, 1
      %p38 = por %p36, %p37
      %p39 = scmp.ne.s32.totalorder %s31, %s34
      %p40 = scmp.eq.s32.totalorder %s21, 0
      %p41 = por %p39, %p40
      %p42 = scmp.ne.s32.totalorder %s31, %s34
      %p43 = scmp.eq.s32.totalorder %s26, 1
      %p44 = por %p42, %p43
      %p45 = scmp.ne.s32.totalorder %s34, %s35
      %p46 = scmp.eq.s32.totalorder %s26, 0
      %p47 = por %p45, %p46
      %p48 = scmp.ne.s32.totalorder %s34, %s35
      %p49 = scmp.eq.s32.totalorder %s27, 1
      %p50 = por %p48, %p49
      %p52 = scmp.ne.s32.totalorder %s35, %s51
      %p53 = scmp.eq.s32.totalorder %s27, 0
      %p54 = por %p52, %p53
      %s55 = ssub.s32 %s21, %s28
      %p56 = scmp.eq.s32.totalorder %s55, 0
      %s58 = sadd.s32 %s57, 1
      %s59 = scalar_select %p56, %s57, %s58
      %p62 = pneg %p56
      %p63 = scmp.eq.s32.totalorder %s21, 1
      %p64 = por %p62, %p63
      %p65 = scmp.ne.s32.totalorder %s57, %s60
      %p66 = scmp.eq.s32.totalorder %s21, 0
      %p67 = por %p65, %p66
      %p68 = scmp.ne.s32.totalorder %s57, %s60
      %p69 = scmp.eq.s32.totalorder %s26, 1
      %p70 = por %p68, %p69
      %p71 = scmp.ne.s32.totalorder %s60, %s61
      %p72 = scmp.eq.s32.totalorder %s26, 0
      %p73 = por %p71, %p72
      %p74 = scmp.ne.s32.totalorder %s60, %s61
      %p75 = scmp.eq.s32.totalorder %s27, 1
      %p76 = por %p74, %p75
      %p78 = scmp.ne.s32.totalorder %s61, %s77
      %p79 = scmp.eq.s32.totalorder %s27, 0
      %p80 = por %p78, %p79
      %s81 = ssub.s32 %s21, %s28
      %p82 = scmp.eq.s32.totalorder %s81, 0
      %s84 = sadd.s32 %s83, 1
      %s85 = scalar_select %p82, %s83, %s84
      %p88 = pneg %p82
      %p89 = scmp.eq.s32.totalorder %s21, 1
      %p90 = por %p88, %p89
      %p91 = scmp.ne.s32.totalorder %s83, %s86
      %p92 = scmp.eq.s32.totalorder %s21, 0
      %p93 = por %p91, %p92
      %p94 = scmp.ne.s32.totalorder %s83, %s86
      %p95 = scmp.eq.s32.totalorder %s26, 1
      %p96 = por %p94, %p95
      %p97 = scmp.ne.s32.totalorder %s86, %s87
      %p98 = scmp.eq.s32.totalorder %s26, 0
      %p99 = por %p97, %p98
      %p100 = scmp.ne.s32.totalorder %s86, %s87
      %p101 = scmp.eq.s32.totalorder %s27, 1
      %p102 = por %p100, %p101
      %p104 = scmp.ne.s32.totalorder %s87, %s103
      %p105 = scmp.eq.s32.totalorder %s27, 0
      %p106 = por %p104, %p105
      %s108 = sadd.s32 %s107, 1
      %p111 = scmp.eq.s32.totalorder %s21, 1
      %p112 = scmp.ne.s32.totalorder %s107, %s109
      %p113 = scmp.eq.s32.totalorder %s21, 0
      %p114 = por %p112, %p113
      %p115 = scmp.ne.s32.totalorder %s107, %s109
      %p116 = scmp.eq.s32.totalorder %s26, 1
      %p117 = por %p115, %p116
      %p118 = scmp.ne.s32.totalorder %s109, %s110
      %p119 = scmp.eq.s32.totalorder %s26, 0
      %p120 = por %p118, %p119
      %p121 = scmp.ne.s32.totalorder %s109, %s110
      %p122 = scmp.eq.s32.totalorder %s27, 1
      %p123 = por %p121, %p122
      %p125 = scmp.ne.s32.totalorder %s110, %s124
      %p126 = scmp.eq.s32.totalorder %s27, 0
      %p127 = por %p125, %p126
      %s129 = sadd.s32 %s128, 1
      %p132 = scmp.eq.s32.totalorder %s21, 1
      %p133 = scmp.ne.s32.totalorder %s128, %s130
      %p134 = scmp.eq.s32.totalorder %s21, 0
      %p135 = por %p133, %p134
      %p136 = scmp.ne.s32.totalorder %s128, %s130
      %p137 = scmp.eq.s32.totalorder %s26, 1
      %p138 = por %p136, %p137
      %p139 = scmp.ne.s32.totalorder %s130, %s131
      %p140 = scmp.eq.s32.totalorder %s26, 0
      %p141 = por %p139, %p140
      %p142 = scmp.ne.s32.totalorder %s130, %s131
      %p143 = scmp.eq.s32.totalorder %s27, 1
      %p144 = por %p142, %p143
      %p146 = scmp.ne.s32.totalorder %s131, %s145
      %p147 = scmp.eq.s32.totalorder %s27, 0
      %p148 = por %p146, %p147
      %s150 = sadd.s32 %s149, 1
      %p153 = scmp.eq.s32.totalorder %s21, 1
      %p154 = scmp.ne.s32.totalorder %s149, %s151
      %p155 = scmp.eq.s32.totalorder %s21, 0
      %p156 = por %p154, %p155
      %p157 = scmp.ne.s32.totalorder %s149, %s151
      %p158 = scmp.eq.s32.totalorder %s26, 1
      %p159 = por %p157, %p158
      %p160 = scmp.ne.s32.totalorder %s151, %s152
      %p161 = scmp.eq.s32.totalorder %s26, 0
      %p162 = por %p160, %p161
      %p163 = scmp.ne.s32.totalorder %s151, %s152
      %p164 = scmp.eq.s32.totalorder %s27, 1
      %p165 = por %p163, %p164
      %p167 = scmp.ne.s32.totalorder %s152, %s166
      %p168 = scmp.eq.s32.totalorder %s27, 0
      %p169 = por %p167, %p168
      %s171 = sadd.s32 %s170, 1
      %p174 = scmp.eq.s32.totalorder %s21, 1
      %p175 = scmp.ne.s32.totalorder %s170, %s172
      %p176 = scmp.eq.s32.totalorder %s21, 0
      %p177 = por %p175, %p176
      %p178 = scmp.ne.s32.totalorder %s170, %s172
      %p179 = scmp.eq.s32.totalorder %s26, 1
      %p180 = por %p178, %p179
      %p181 = scmp.ne.s32.totalorder %s172, %s173
      %p182 = scmp.eq.s32.totalorder %s26, 0
      %p183 = por %p181, %p182
      %p184 = scmp.ne.s32.totalorder %s172, %s173
      %p185 = scmp.eq.s32.totalorder %s27, 1
      %p186 = por %p184, %p185
      %p188 = scmp.ne.s32.totalorder %s173, %s187
      %p189 = scmp.eq.s32.totalorder %s27, 0
      %p190 = por %p188, %p189
      %s192 = sadd.s32 %s191, 1
      %p195 = scmp.eq.s32.totalorder %s21, 1
      %p196 = scmp.ne.s32.totalorder %s191, %s193
      %p197 = scmp.eq.s32.totalorder %s21, 0
      %p198 = por %p196, %p197
      %p199 = scmp.ne.s32.totalorder %s191, %s193
      %p200 = scmp.eq.s32.totalorder %s26, 1
      %p201 = por %p199, %p200
      %p202 = scmp.ne.s32.totalorder %s193, %s194
      %p203 = scmp.eq.s32.totalorder %s26, 0
      %p204 = por %p202, %p203
      %p205 = scmp.ne.s32.totalorder %s193, %s194
      %p206 = scmp.eq.s32.totalorder %s27, 1
      %p207 = por %p205, %p206
      %p209 = scmp.ne.s32.totalorder %s194, %s208
      %p210 = scmp.eq.s32.totalorder %s27, 0
      %p211 = por %p209, %p210
      %s213 = sadd.s32 %s212, 1
      %p216 = scmp.eq.s32.totalorder %s21, 1
      %p217 = scmp.ne.s32.totalorder %s212, %s214
      %p218 = scmp.eq.s32.totalorder %s21, 0
      %p219 = por %p217, %p218
      %p220 = scmp.ne.s32.totalorder %s212, %s214
      %p221 = scmp.eq.s32.totalorder %s26, 1
      %p222 = por %p220, %p221
      %p223 = scmp.ne.s32.totalorder %s214, %s215
      %p224 = scmp.eq.s32.totalorder %s26, 0
      %p225 = por %p223, %p224
      %p226 = scmp.ne.s32.totalorder %s214, %s215
      %p227 = scmp.eq.s32.totalorder %s27, 1
      %p228 = por %p226, %p227
      %p230 = scmp.ne.s32.totalorder %s215, %s229
      %p231 = scmp.eq.s32.totalorder %s27, 0
      %p232 = por %p230, %p231
      %s234 = sadd.s32 %s233, 1
      %p237 = scmp.eq.s32.totalorder %s21, 1
      %p238 = scmp.ne.s32.totalorder %s233, %s235
      %p239 = scmp.eq.s32.totalorder %s21, 0
      %p240 = por %p238, %p239
      %p241 = scmp.ne.s32.totalorder %s233, %s235
      %p242 = scmp.eq.s32.totalorder %s26, 1
      %p243 = por %p241, %p242
      %p244 = scmp.ne.s32.totalorder %s235, %s236
      %p245 = scmp.eq.s32.totalorder %s26, 0
      %p246 = por %p244, %p245
      %p247 = scmp.ne.s32.totalorder %s235, %s236
      %p248 = scmp.eq.s32.totalorder %s27, 1
      %p249 = por %p247, %p248
      %p251 = scmp.ne.s32.totalorder %s236, %s250
      %p252 = scmp.eq.s32.totalorder %s27, 0
      %p253 = por %p251, %p252
      %s255 = sadd.s32 %s254, 1
      %p258 = scmp.eq.s32.totalorder %s21, 1
      %p259 = scmp.ne.s32.totalorder %s254, %s256
      %p260 = scmp.eq.s32.totalorder %s21, 0
      %p261 = por %p259, %p260
      %p262 = scmp.ne.s32.totalorder %s254, %s256
      %p263 = scmp.eq.s32.totalorder %s26, 1
      %p264 = por %p262, %p263
      %p265 = scmp.ne.s32.totalorder %s256, %s257
      %p266 = scmp.eq.s32.totalorder %s26, 0
      %p267 = por %p265, %p266
      %p268 = scmp.ne.s32.totalorder %s256, %s257
      %p269 = scmp.eq.s32.totalorder %s27, 1
      %p270 = por %p268, %p269
      %p272 = scmp.ne.s32.totalorder %s257, %s271
      %p273 = scmp.eq.s32.totalorder %s27, 0
      %p274 = por %p272, %p273
      %s276 = sadd.s32 %s275, 1
      %p279 = scmp.eq.s32.totalorder %s21, 1
      %p280 = scmp.ne.s32.totalorder %s275, %s277
      %p281 = scmp.eq.s32.totalorder %s21, 0
      %p282 = por %p280, %p281
      %p283 = scmp.ne.s32.totalorder %s275, %s277
      %p284 = scmp.eq.s32.totalorder %s26, 1
      %p285 = por %p283, %p284
      %p286 = scmp.ne.s32.totalorder %s277, %s278
      %p287 = scmp.eq.s32.totalorder %s26, 0
      %p288 = por %p286, %p287
      %p289 = scmp.ne.s32.totalorder %s277, %s278
      %p290 = scmp.eq.s32.totalorder %s27, 1
      %p291 = por %p289, %p290
      %p293 = scmp.ne.s32.totalorder %s278, %s292
      %p294 = scmp.eq.s32.totalorder %s27, 0
      %p295 = por %p293, %p294
      %s296 = ssub.s32 %s21, %s28
      %p297 = scmp.eq.s32.totalorder %s296, 0
      %s299 = sadd.s32 %s298, 1
      %s300 = scalar_select %p297, %s298, %s299
      %p303 = pneg %p297
      %p304 = scmp.eq.s32.totalorder %s21, 1
      %p305 = por %p303, %p304
      %p306 = scmp.ne.s32.totalorder %s298, %s301
      %p307 = scmp.eq.s32.totalorder %s21, 0
      %p308 = por %p306, %p307
      %p309 = scmp.ne.s32.totalorder %s298, %s301
      %p310 = scmp.eq.s32.totalorder %s26, 1
      %p311 = por %p309, %p310
      %p312 = scmp.ne.s32.totalorder %s301, %s302
      %p313 = scmp.eq.s32.totalorder %s26, 0
      %p314 = por %p312, %p313
      %p315 = scmp.ne.s32.totalorder %s301, %s302
      %p316 = scmp.eq.s32.totalorder %s27, 1
      %p317 = por %p315, %p316
      %p319 = scmp.ne.s32.totalorder %s302, %s318
      %p320 = scmp.eq.s32.totalorder %s27, 0
      %p321 = por %p319, %p320
      %p322 = scmp.le.s32.totalorder 1, %s21
      %p323 = scmp.lt.s32.totalorder %s21, 3
      %p324 = pnand %p322, %p323
      %p325 = pneg %p324
      // Predicated region
      $region9: #{tpu_custom_call.1} parent=5 // pred_check
        _
      $region10: #{tpu_custom_call.1} parent=5 // pred_check_branch
        %327 = sbr.rel (%p324) target = $region12
      $region11: #{tpu_custom_call.1} parent=5 // pred_region
        %s328 = ssub.s32 %s21, 1
        // Predicated region
        $region13: #{tpu_custom_call.1} parent=11 // pred_check
          %p329 = pneg %p120
        $region14: #{tpu_custom_call.1} parent=11 // pred_check_branch
          %331 = sbr.rel (%p329) target = $region16
        $region15: #{tpu_custom_call.1} parent=11 // pred_region
          _
        $region16: #{tpu_custom_call.1} parent=11 // pred_fallthru
          _
        // Predicated region
        $region17: #{tpu_custom_call.1} parent=11 // pred_check
          %p332 = pneg %p141
        $region18: #{tpu_custom_call.1} parent=11 // pred_check_branch
          %334 = sbr.rel (%p332) target = $region20
        $region19: #{tpu_custom_call.1} parent=11 // pred_region
          _
        $region20: #{tpu_custom_call.1} parent=11 // pred_fallthru
          _
        // Predicated region
        $region21: #{tpu_custom_call.1} parent=11 // pred_check
          %p335 = pneg %p162
        $region22: #{tpu_custom_call.1} parent=11 // pred_check_branch
          %337 = sbr.rel (%p335) target = $region24
        $region23: #{tpu_custom_call.1} parent=11 // pred_region
          _
        $region24: #{tpu_custom_call.1} parent=11 // pred_fallthru
          _
        // Predicated region
        $region25: #{tpu_custom_call.1} parent=11 // pred_check
          %p338 = pneg %p183
        $region26: #{tpu_custom_call.1} parent=11 // pred_check_branch
          %340 = sbr.rel (%p338) target = $region28
        $region27: #{tpu_custom_call.1} parent=11 // pred_region
          _
        $region28: #{tpu_custom_call.1} parent=11 // pred_fallthru
          _
        // Predicated region
        $region29: #{tpu_custom_call.1} parent=11 // pred_check
          %p341 = pneg %p204
        $region30: #{tpu_custom_call.1} parent=11 // pred_check_branch
          %343 = sbr.rel (%p341) target = $region32
        $region31: #{tpu_custom_call.1} parent=11 // pred_region
          _
        $region32: #{tpu_custom_call.1} parent=11 // pred_fallthru
          _
        // Predicated region
        $region33: #{tpu_custom_call.1} parent=11 // pred_check
          %p344 = pneg %p225
        $region34: #{tpu_custom_call.1} parent=11 // pred_check_branch
          %346 = sbr.rel (%p344) target = $region36
        $region35: #{tpu_custom_call.1} parent=11 // pred_region
          _
        $region36: #{tpu_custom_call.1} parent=11 // pred_fallthru
          _
        // Predicated region
        $region37: #{tpu_custom_call.1} parent=11 // pred_check
          %p347 = pneg %p246
        $region38: #{tpu_custom_call.1} parent=11 // pred_check_branch
          %349 = sbr.rel (%p347) target = $region40
        $region39: #{tpu_custom_call.1} parent=11 // pred_region
          _
        $region40: #{tpu_custom_call.1} parent=11 // pred_fallthru
          _
        // Predicated region
        $region41: #{tpu_custom_call.1} parent=11 // pred_check
          %p350 = pneg %p267
        $region42: #{tpu_custom_call.1} parent=11 // pred_check_branch
          %352 = sbr.rel (%p350) target = $region44
        $region43: #{tpu_custom_call.1} parent=11 // pred_region
          _
        $region44: #{tpu_custom_call.1} parent=11 // pred_fallthru
          _
        // Predicated region
        $region45: #{tpu_custom_call.1} parent=11 // pred_check
          %p353 = pneg %p288
        $region46: #{tpu_custom_call.1} parent=11 // pred_check_branch
          %355 = sbr.rel (%p353) target = $region48
        $region47: #{tpu_custom_call.1} parent=11 // pred_region
          _
        $region48: #{tpu_custom_call.1} parent=11 // pred_fallthru
          _
      $region12: #{tpu_custom_call.1} parent=5 // pred_fallthru
        _
      %p356 = scmp.lt.s32.totalorder %s21, 2
      // Predicated region
      $region49: #{tpu_custom_call.1} parent=5 // pred_check
        %p357 = pneg %p356
      $region50: #{tpu_custom_call.1} parent=5 // pred_check_branch
        %359 = sbr.rel (%p357) target = $region52
      $region51: #{tpu_custom_call.1} parent=5 // pred_region
        // Predicated region
        $region53: #{tpu_custom_call.1} parent=51 // pred_check
          %p360 = pneg %p41
        $region54: #{tpu_custom_call.1} parent=51 // pred_check_branch
          %362 = sbr.rel (%p360) target = $region56
        $region55: #{tpu_custom_call.1} parent=51 // pred_region
          %p363 = scmp.lt.s32.totalorder %s21, 1
          %s364 = scalar_select %p363, %s21, 1
          %s365 = smul.addr %s364, 4
          %s366 = scalar_lea.vmem %s0, %s365
        $region56: #{tpu_custom_call.1} parent=51 // pred_fallthru
          _
        // Predicated region
        $region57: #{tpu_custom_call.1} parent=51 // pred_check
          %p367 = pneg %p67
        $region58: #{tpu_custom_call.1} parent=51 // pred_check_branch
          %369 = sbr.rel (%p367) target = $region60
        $region59: #{tpu_custom_call.1} parent=51 // pred_region
          %p370 = scmp.lt.s32.totalorder %s21, 1
          %s371 = scalar_select %p370, %s21, 1
          %s372 = smul.addr %s371, 4
          %s373 = scalar_lea.vmem %s1, %s372
        $region60: #{tpu_custom_call.1} parent=51 // pred_fallthru
          _
        // Predicated region
        $region61: #{tpu_custom_call.1} parent=51 // pred_check
          %p374 = pneg %p93
        $region62: #{tpu_custom_call.1} parent=51 // pred_check_branch
          %376 = sbr.rel (%p374) target = $region64
        $region63: #{tpu_custom_call.1} parent=51 // pred_region
          %p377 = scmp.lt.s32.totalorder %s21, 1
          %s378 = scalar_select %p377, %s21, 1
          %s379 = smul.addr %s378, 2
          %s380 = smul.addr %s379, 4
          %s381 = scalar_lea.vmem %s2, %s380
        $region64: #{tpu_custom_call.1} parent=51 // pred_fallthru
          _
      $region52: #{tpu_custom_call.1} parent=5 // pred_fallthru
        _
      %p382 = scmp.le.s32.totalorder 1, %s21
      %p383 = scmp.lt.s32.totalorder %s21, 3
      %p384 = pnand %p382, %p383
      %p385 = pneg %p384
      // Predicated region
      $region65: #{tpu_custom_call.1} parent=5 // pred_check
        _
      $region66: #{tpu_custom_call.1} parent=5 // pred_check_branch
        %387 = sbr.rel (%p384) target = $region68
      $region67: #{tpu_custom_call.1} parent=5 // pred_region
        %s388 = ssub.s32 %s21, 1
        %p389 = scmp.lt.s32.totalorder %s26, 1
        %s390 = scalar_select %p389, %s26, 1
        %s391 = smul.addr %s390, 4
        %s392 = scalar_lea.vmem %s0, %s391
        %p393 = pneg %p47
        %p394 = pneg %p44
        %p395 = scmp.lt.s32.totalorder %s26, 1
        %s396 = scalar_select %p395, %s26, 1
        %s397 = smul.addr %s396, 4
        %s398 = scalar_lea.vmem %s1, %s397
        %p399 = pneg %p73
        %p400 = pneg %p70
        %p401 = scmp.lt.s32.totalorder %s26, 1
        %s402 = scalar_select %p401, %s26, 1
        %s403 = smul.addr %s402, 2
        %s404 = smul.addr %s403, 4
        %s405 = scalar_lea.vmem %s2, %s404
        %p406 = pneg %p99
        %p407 = pneg %p96
        %p408 = pneg %p120
        %p409 = pneg %p117
        %p410 = pneg %p141
        %p411 = pneg %p138
        %p412 = pneg %p162
        %p413 = pneg %p159
        %p414 = pneg %p183
        %p415 = pneg %p180
        %p416 = pneg %p204
        %p417 = pneg %p201
        %p418 = pneg %p225
        %p419 = pneg %p222
        %p420 = pneg %p246
        %p421 = pneg %p243
        %p422 = pneg %p267
        %p423 = pneg %p264
        %p424 = pneg %p288
        %p425 = pneg %p285
        %p426 = pneg %p314
        %p427 = pneg %p311
        %s428 = sand.u32 %s301, 1
        %s429 = scalar_lea.sflag [#allocation7], %s428
        %s430 = sand.u32 %s301, 1
        %s431 = smul.addr %s430, 2
        %s432 = scalar_lea.vmem [#allocation6], %s431
        %p433 = scmp.lt.s32.totalorder %s26, 1
        %s434 = scalar_select %p433, %s26, 1
        %s435 = smul.addr %s434, 4
        %s436 = scalar_lea.vmem %s0, %s435
        %p437 = scmp.lt.s32.totalorder %s26, 1
        %s438 = scalar_select %p437, %s26, 1
        %s439 = smul.addr %s438, 4
        %s440 = scalar_lea.vmem %s1, %s439
        %p441 = scmp.lt.s32.totalorder %s26, 1
        %s442 = scalar_select %p441, %s26, 1
        %s443 = smul.addr %s442, 2
        %s444 = smul.addr %s443, 4
        %s445 = scalar_lea.vmem %s2, %s444
        %v446 = vld [vmem:[%s436] sm:$0xf]
        %v447 = vld [vmem:[%s8] sm:$0xff]
        %v448 = vld [vmem:[%s8 + $0x8] sm:$0xff]
        %v449 = vld [vmem:[%s8 + $0x10] sm:$0xff]
        %v450 = vld [vmem:[%s8 + $0x18] sm:$0xff]
        %v451 = vld [vmem:[%s8 + $0x20] sm:$0xff]
        %v452 = vld [vmem:[%s8 + $0x28] sm:$0xff]
        %v453 = vld [vmem:[%s8 + $0x30] sm:$0xff]
        %v454 = vld [vmem:[%s8 + $0x38] sm:$0xff]
        %vm455 = vcmask 523264
        %v457 = vsel %vm455, %v446, 0
        %459 = vmatprep.subr.mxu0 0.0
        %460 = vmatpush1.msra.mxu0 %v447
        %461 = vmatprep.subr.mxu0 0.0
        %462 = vmatpush1.msra.mxu0 %v448
        %463 = vmatprep.subr.mxu0 0.0
        %464 = vmatpush1.msra.mxu0 %v449
        %465 = vmatprep.subr.mxu0 0.0
        %466 = vmatpush1.msra.mxu0 %v450
        %467 = vmatprep.subr.mxu0 0.0
        %468 = vmatpush1.msra.mxu0 %v451
        %469 = vmatprep.subr.mxu0 0.0
        %470 = vmatpush1.msra.mxu0 %v452
        %471 = vmatprep.subr.mxu0 0.0
        %472 = vmatpush1.msra.mxu0 %v453
        %473 = vmatprep.subr.mxu0 0.0
        %474 = vmatpush1.msra.mxu0 %v454
        %475 = vmatprep.subr.mxu0 0.0
        %476 = vmatpush1.msra.mxu0 0.0
        %477 = vmatprep.subr.mxu0 0.0
        %478 = vmatpush1.msra.mxu0 0.0
        %479 = vmatprep.subr.mxu0 0.0
        %480 = vmatpush1.msra.mxu0 0.0
        %481 = vmatprep.subr.mxu0 0.0
        %482 = vmatpush1.msra.mxu0 0.0
        %483 = vmatprep.subr.mxu0 0.0
        %484 = vmatpush1.msra.mxu0 0.0
        %485 = vmatprep.subr.mxu0 0.0
        %486 = vmatpush1.msra.mxu0 0.0
        %487 = vmatprep.subr.mxu0 0.0
        %488 = vmatpush1.msra.mxu0 0.0
        %489 = vmatprep.subr.mxu0 0.0
        %490 = vmatpush1.msra.mxu0 0.0
        %491 = vmatprep.subr.mxu0 0.0
        %492 = vmatpush1.msra.mxu0 0.0
        %493 = vmatprep.subr.mxu0 0.0
        %494 = vmatpush1.msra.mxu0 0.0
        %495 = vmatprep.subr.mxu0 0.0
        %496 = vmatpush1.msra.mxu0 0.0
        %497 = vmatprep.subr.mxu0 0.0
        %498 = vmatpush1.msra.mxu0 0.0
        %499 = vmatprep.subr.mxu0 0.0
        %500 = vmatpush1.msra.mxu0 0.0
        %501 = vmatprep.subr.mxu0 0.0
        %502 = vmatpush1.msra.mxu0 0.0
        %503 = vmatprep.subr.mxu0 0.0
        %504 = vmatpush1.msra.mxu0 0.0
        %505 = vmatprep.subr.mxu0 0.0
        %506 = vmatpush1.msra.mxu0 0.0
        %507 = vmatprep.subr.mxu0 0.0
        %508 = vmatpush1.msra.mxu0 0.0
        %509 = vmatprep.subr.mxu0 0.0
        %510 = vmatpush1.msra.mxu0 0.0
        %511 = vmatprep.subr.mxu0 0.0
        %512 = vmatpush1.msra.mxu0 0.0
        %513 = vmatprep.subr.mxu0 0.0
        %514 = vmatpush1.msra.mxu0 0.0
        %515 = vmatprep.subr.mxu0 0.0
        %516 = vmatpush1.msra.mxu0 0.0
        %517 = vmatprep.subr.mxu0 0.0
        %518 = vmatpush1.msra.mxu0 0.0
        %519 = vmatprep.subr.mxu0 0.0
        %520 = vmatpush1.msra.mxu0 0.0
        %521 = vmatprep.subr.mxu0 0.0
        %522 = vmatpush1.msra.mxu0 0.0
        %523 = vmatprep.mubr.f32.mxu0 0.0
        %524 = vmatmul.mubr.f32.gmra.mrb[0].mxu0 %v457
        %v525 = vpop.f32.mrb[0].mxu0
        %v526 = vadd.f32 0.0, %v525
        %v527 = vpop.f32.mrb[0].mxu0
        %528 = vdwg.mxu0
        %vm529 = vcmask 830464
        %530 = vst.msk [vmem:[#allocation2] sm:$0xf] %vm529, %v526
        %v531 = vld [vmem:[%s440] sm:$0xf]
        %v532 = vld [vmem:[%s8] sm:$0xff]
        %v533 = vld [vmem:[%s8 + $0x8] sm:$0xff]
        %v534 = vld [vmem:[%s8 + $0x10] sm:$0xff]
        %v535 = vld [vmem:[%s8 + $0x18] sm:$0xff]
        %v536 = vld [vmem:[%s8 + $0x20] sm:$0xff]
        %v537 = vld [vmem:[%s8 + $0x28] sm:$0xff]
        %v538 = vld [vmem:[%s8 + $0x30] sm:$0xff]
        %v539 = vld [vmem:[%s8 + $0x38] sm:$0xff]
        %v541 = vsel %vm455, %v531, 0
        %543 = vmatprep.subr.mxu0 0.0
        %544 = vmatpush1.msra.mxu0 %v532
        %545 = vmatprep.subr.mxu0 0.0
        %546 = vmatpush1.msra.mxu0 %v533
        %547 = vmatprep.subr.mxu0 0.0
        %548 = vmatpush1.msra.mxu0 %v534
        %549 = vmatprep.subr.mxu0 0.0
        %550 = vmatpush1.msra.mxu0 %v535
        %551 = vmatprep.subr.mxu0 0.0
        %552 = vmatpush1.msra.mxu0 %v536
        %553 = vmatprep.subr.mxu0 0.0
        %554 = vmatpush1.msra.mxu0 %v537
        %555 = vmatprep.subr.mxu0 0.0
        %556 = vmatpush1.msra.mxu0 %v538
        %557 = vmatprep.subr.mxu0 0.0
        %558 = vmatpush1.msra.mxu0 %v539
        %559 = vmatprep.subr.mxu0 0.0
        %560 = vmatpush1.msra.mxu0 0.0
        %561 = vmatprep.subr.mxu0 0.0
        %562 = vmatpush1.msra.mxu0 0.0
        %563 = vmatprep.subr.mxu0 0.0
        %564 = vmatpush1.msra.mxu0 0.0
        %565 = vmatprep.subr.mxu0 0.0
        %566 = vmatpush1.msra.mxu0 0.0
        %567 = vmatprep.subr.mxu0 0.0
        %568 = vmatpush1.msra.mxu0 0.0
        %569 = vmatprep.subr.mxu0 0.0
        %570 = vmatpush1.msra.mxu0 0.0
        %571 = vmatprep.subr.mxu0 0.0
        %572 = vmatpush1.msra.mxu0 0.0
        %573 = vmatprep.subr.mxu0 0.0
        %574 = vmatpush1.msra.mxu0 0.0
        %575 = vmatprep.subr.mxu0 0.0
        %576 = vmatpush1.msra.mxu0 0.0
        %577 = vmatprep.subr.mxu0 0.0
        %578 = vmatpush1.msra.mxu0 0.0
        %579 = vmatprep.subr.mxu0 0.0
        %580 = vmatpush1.msra.mxu0 0.0
        %581 = vmatprep.subr.mxu0 0.0
        %582 = vmatpush1.msra.mxu0 0.0
        %583 = vmatprep.subr.mxu0 0.0
        %584 = vmatpush1.msra.mxu0 0.0
        %585 = vmatprep.subr.mxu0 0.0
        %586 = vmatpush1.msra.mxu0 0.0
        %587 = vmatprep.subr.mxu0 0.0
        %588 = vmatpush1.msra.mxu0 0.0
        %589 = vmatprep.subr.mxu0 0.0
        %590 = vmatpush1.msra.mxu0 0.0
        %591 = vmatprep.subr.mxu0 0.0
        %592 = vmatpush1.msra.mxu0 0.0
        %593 = vmatprep.subr.mxu0 0.0
        %594 = vmatpush1.msra.mxu0 0.0
        %595 = vmatprep.subr.mxu0 0.0
        %596 = vmatpush1.msra.mxu0 0.0
        %597 = vmatprep.subr.mxu0 0.0
        %598 = vmatpush1.msra.mxu0 0.0
        %599 = vmatprep.subr.mxu0 0.0
        %600 = vmatpush1.msra.mxu0 0.0
        %601 = vmatprep.subr.mxu0 0.0
        %602 = vmatpush1.msra.mxu0 0.0
        %603 = vmatprep.subr.mxu0 0.0
        %604 = vmatpush1.msra.mxu0 0.0
        %605 = vmatprep.subr.mxu0 0.0
        %606 = vmatpush1.msra.mxu0 0.0
        %607 = vmatprep.mubr.f32.mxu0 0.0
        %608 = vmatmul.mubr.f32.gmra.mrb[0].mxu0 %v541
        %v609 = vpop.f32.mrb[0].mxu0
        %v610 = vadd.f32 0.0, %v609
        %v611 = vpop.f32.mrb[0].mxu0
        %612 = vdwg.mxu0
        %613 = vst.msk [vmem:[#allocation2 + $0x4] sm:$0xf] %vm529, %v610
        %v614 = vld [vmem:[#allocation2] sm:$0xff]
        %vm615 = vcmask 654336
        %616 = vst.msk [vmem:[#allocation4] sm:$0xff] %vm615, %v614
        %v617 = vld [vmem:[#allocation2] sm:$0xff]
        %619 = vrot.lane.b32.xlu0 %v617, 127
        %v620 = vpop.permute.xlu0 %619
        %622 = vst.msk [vmem:[#allocation4 + $0x8] sm:$0xff] %vm615, %v620
        %v623 = vld [vmem:[#allocation2] sm:$0xff]
        %625 = vrot.lane.b32.xlu0 %v623, 126
        %v626 = vpop.permute.xlu0 %625
        %628 = vst.msk [vmem:[#allocation4 + $0x10] sm:$0xff] %vm615, %v626
        %v629 = vld [vmem:[#allocation2] sm:$0xff]
        %631 = vrot.lane.b32.xlu0 %v629, 118
        %v632 = vpop.permute.xlu0 %631
        %634 = vst.msk [vmem:[#allocation4 + $0x18] sm:$0xff] %vm615, %v632
        %v635 = vld [vmem:[#allocation2] sm:$0xff]
        %637 = vrot.lane.b32.xlu0 %v635, 117
        %v638 = vpop.permute.xlu0 %637
        %640 = vst.msk [vmem:[#allocation4 + $0x20] sm:$0xff] %vm615, %v638
        %v641 = vld [vmem:[#allocation2] sm:$0xff]
        %643 = vrot.lane.b32.xlu0 %v641, 116
        %v644 = vpop.permute.xlu0 %643
        %646 = vst.msk [vmem:[#allocation4 + $0x28] sm:$0xff] %vm615, %v644
        %v647 = vld [vmem:[#allocation2] sm:$0xff]
        %649 = vrot.lane.b32.xlu0 %v647, 108
        %v650 = vpop.permute.xlu0 %649
        %652 = vst.msk [vmem:[#allocation4 + $0x30] sm:$0xff] %vm615, %v650
        %v653 = vld [vmem:[#allocation2] sm:$0xff]
        %655 = vrot.lane.b32.xlu0 %v653, 107
        %v656 = vpop.permute.xlu0 %655
        %658 = vst.msk [vmem:[#allocation4 + $0x38] sm:$0xff] %vm615, %v656
        %v659 = vld [vmem:[#allocation2] sm:$0xff]
        %661 = vrot.lane.b32.xlu0 %v659, 106
        %v662 = vpop.permute.xlu0 %661
        %664 = vst.msk [vmem:[#allocation4 + $0x40] sm:$0xff] %vm615, %v662
        %v665 = vld [vmem:[%s3] sm:$0xff]
        %v666 = vld [vmem:[#allocation4] sm:$0xff]
        %v667 = vld [vmem:[#allocation4 + $0x8] sm:$0xff]
        %v668 = vld [vmem:[#allocation4 + $0x10] sm:$0xff]
        %v669 = vld [vmem:[#allocation4 + $0x18] sm:$0xff]
        %v670 = vld [vmem:[#allocation4 + $0x20] sm:$0xff]
        %v671 = vld [vmem:[#allocation4 + $0x28] sm:$0xff]
        %v672 = vld [vmem:[#allocation4 + $0x30] sm:$0xff]
        %v673 = vld [vmem:[#allocation4 + $0x38] sm:$0xff]
        %v674 = vld [vmem:[#allocation4 + $0x40] sm:$0xff]
        %v675 = vld [vmem:[%s5] sm:$0xff]
        %677 = vset.pattern.permute.xlu0 0
        %678 = vperm.xlu0 %677, %v675
        %v679 = vpop.permute.xlu0 %678
        %vm681 = vcmask 588800
        %v683 = vsel %vm681, %v665, 0
        %685 = vmatprep.subr.mxu0 0.0
        %686 = vmatpush1.msra.mxu0 %v666
        %687 = vmatprep.subr.mxu0 0.0
        %688 = vmatpush1.msra.mxu0 %v667
        %689 = vmatprep.subr.mxu0 0.0
        %690 = vmatpush1.msra.mxu0 %v668
        %691 = vmatprep.subr.mxu0 0.0
        %692 = vmatpush1.msra.mxu0 %v669
        %693 = vmatprep.subr.mxu0 0.0
        %694 = vmatpush1.msra.mxu0 %v670
        %695 = vmatprep.subr.mxu0 0.0
        %696 = vmatpush1.msra.mxu0 %v671
        %697 = vmatprep.subr.mxu0 0.0
        %698 = vmatpush1.msra.mxu0 %v672
        %699 = vmatprep.subr.mxu0 0.0
        %700 = vmatpush1.msra.mxu0 %v673
        %701 = vmatprep.subr.mxu0 0.0
        %702 = vmatpush1.msra.mxu0 %v674
        %703 = vmatprep.subr.mxu0 0.0
        %704 = vmatpush1.msra.mxu0 0.0
        %705 = vmatprep.subr.mxu0 0.0
        %706 = vmatpush1.msra.mxu0 0.0
        %707 = vmatprep.subr.mxu0 0.0
        %708 = vmatpush1.msra.mxu0 0.0
        %709 = vmatprep.subr.mxu0 0.0
        %710 = vmatpush1.msra.mxu0 0.0
        %711 = vmatprep.subr.mxu0 0.0
        %712 = vmatpush1.msra.mxu0 0.0
        %713 = vmatprep.subr.mxu0 0.0
        %714 = vmatpush1.msra.mxu0 0.0
        %715 = vmatprep.subr.mxu0 0.0
        %716 = vmatpush1.msra.mxu0 0.0
        %717 = vmatprep.subr.mxu0 0.0
        %718 = vmatpush1.msra.mxu0 0.0
        %719 = vmatprep.subr.mxu0 0.0
        %720 = vmatpush1.msra.mxu0 0.0
        %721 = vmatprep.subr.mxu0 0.0
        %722 = vmatpush1.msra.mxu0 0.0
        %723 = vmatprep.subr.mxu0 0.0
        %724 = vmatpush1.msra.mxu0 0.0
        %725 = vmatprep.subr.mxu0 0.0
        %726 = vmatpush1.msra.mxu0 0.0
        %727 = vmatprep.subr.mxu0 0.0
        %728 = vmatpush1.msra.mxu0 0.0
        %729 = vmatprep.subr.mxu0 0.0
        %730 = vmatpush1.msra.mxu0 0.0
        %731 = vmatprep.subr.mxu0 0.0
        %732 = vmatpush1.msra.mxu0 0.0
        %733 = vmatprep.subr.mxu0 0.0
        %734 = vmatpush1.msra.mxu0 0.0
        %735 = vmatprep.subr.mxu0 0.0
        %736 = vmatpush1.msra.mxu0 0.0
        %737 = vmatprep.subr.mxu0 0.0
        %738 = vmatpush1.msra.mxu0 0.0
        %739 = vmatprep.subr.mxu0 0.0
        %740 = vmatpush1.msra.mxu0 0.0
        %741 = vmatprep.subr.mxu0 0.0
        %742 = vmatpush1.msra.mxu0 0.0
        %743 = vmatprep.subr.mxu0 0.0
        %744 = vmatpush1.msra.mxu0 0.0
        %745 = vmatprep.subr.mxu0 0.0
        %746 = vmatpush1.msra.mxu0 0.0
        %747 = vmatprep.subr.mxu0 0.0
        %748 = vmatpush1.msra.mxu0 0.0
        %749 = vmatprep.mubr.f32.mxu0 0.0
        %750 = vmatmul.mubr.f32.gmra.mrb[0].mxu0 %v683
        %v751 = vpop.f32.mrb[0].mxu0
        %v752 = vadd.f32 %v679, %v751
        %v753 = vpop.f32.mrb[0].mxu0
        %754 = vdwg.mxu0
        %v755 = vmax.f32 %v752, 0.0
        %v756 = vld [vmem:[%s10] sm:$0xff]
        %v757 = vld [vmem:[%s10 + $0x8] sm:$0xff]
        %v758 = vld [vmem:[%s10 + $0x10] sm:$0xff]
        %v759 = vld [vmem:[%s10 + $0x18] sm:$0xff]
        %v760 = vld [vmem:[%s10 + $0x20] sm:$0xff]
        %v761 = vld [vmem:[%s10 + $0x28] sm:$0xff]
        %v762 = vld [vmem:[%s10 + $0x30] sm:$0xff]
        %v763 = vld [vmem:[%s10 + $0x38] sm:$0xff]
        %v764 = vld [vmem:[%s10 + $0x40] sm:$0xff]
        %v765 = vld [vmem:[%s10 + $0x48] sm:$0xff]
        %v766 = vld [vmem:[%s10 + $0x50] sm:$0xff]
        %v767 = vld [vmem:[%s10 + $0x58] sm:$0xff]
        %v768 = vld [vmem:[%s10 + $0x60] sm:$0xff]
        %v769 = vld [vmem:[%s10 + $0x68] sm:$0xff]
        %v770 = vld [vmem:[%s10 + $0x70] sm:$0xff]
        %v771 = vld [vmem:[%s10 + $0x78] sm:$0xff]
        %v772 = vld [vmem:[%s10 + $0x80] sm:$0xff]
        %v773 = vld [vmem:[%s10 + $0x88] sm:$0xff]
        %v774 = vld [vmem:[%s10 + $0x90] sm:$0xff]
        %v775 = vld [vmem:[%s10 + $0x98] sm:$0xff]
        %v776 = vld [vmem:[%s10 + $0xa0] sm:$0xff]
        %v777 = vld [vmem:[%s10 + $0xa8] sm:$0xff]
        %v778 = vld [vmem:[%s10 + $0xb0] sm:$0xff]
        %v779 = vld [vmem:[%s10 + $0xb8] sm:$0xff]
        %v780 = vld [vmem:[%s10 + $0xc0] sm:$0xff]
        %v781 = vld [vmem:[%s10 + $0xc8] sm:$0xff]
        %v782 = vld [vmem:[%s10 + $0xd0] sm:$0xff]
        %v783 = vld [vmem:[%s10 + $0xd8] sm:$0xff]
        %v784 = vld [vmem:[%s10 + $0xe0] sm:$0xff]
        %v785 = vld [vmem:[%s10 + $0xe8] sm:$0xff]
        %v787 = vsel %vm615, %v755, 0
        %789 = vmatprep.subr.mxu0 %v757
        %790 = vmatpush1.msra.mxu0 %v756
        %791 = vmatprep.subr.mxu0 %v760
        %792 = vmatpush1.msra.mxu0 %v759
        %793 = vmatprep.subr.mxu0 %v763
        %794 = vmatpush1.msra.mxu0 %v762
        %795 = vmatprep.subr.mxu0 %v766
        %796 = vmatpush1.msra.mxu0 %v765
        %797 = vmatprep.subr.mxu0 %v769
        %798 = vmatpush1.msra.mxu0 %v768
        %799 = vmatprep.subr.mxu0 %v772
        %800 = vmatpush1.msra.mxu0 %v771
        %801 = vmatprep.subr.mxu0 %v775
        %802 = vmatpush1.msra.mxu0 %v774
        %803 = vmatprep.subr.mxu0 %v778
        %804 = vmatpush1.msra.mxu0 %v777
        %805 = vmatprep.subr.mxu0 %v781
        %806 = vmatpush1.msra.mxu0 %v780
        %807 = vmatprep.subr.mxu0 %v784
        %808 = vmatpush1.msra.mxu0 %v783
        %809 = vmatprep.subr.mxu0 0.0
        %810 = vmatpush1.msra.mxu0 0.0
        %811 = vmatprep.subr.mxu0 0.0
        %812 = vmatpush1.msra.mxu0 0.0
        %813 = vmatprep.subr.mxu0 0.0
        %814 = vmatpush1.msra.mxu0 0.0
        %815 = vmatprep.subr.mxu0 0.0
        %816 = vmatpush1.msra.mxu0 0.0
        %817 = vmatprep.subr.mxu0 0.0
        %818 = vmatpush1.msra.mxu0 0.0
        %819 = vmatprep.subr.mxu0 0.0
        %820 = vmatpush1.msra.mxu0 0.0
        %821 = vmatprep.subr.mxu0 0.0
        %822 = vmatpush1.msra.mxu0 0.0
        %823 = vmatprep.subr.mxu0 0.0
        %824 = vmatpush1.msra.mxu0 0.0
        %825 = vmatprep.subr.mxu0 0.0
        %826 = vmatpush1.msra.mxu0 0.0
        %827 = vmatprep.subr.mxu0 0.0
        %828 = vmatpush1.msra.mxu0 0.0
        %829 = vmatprep.subr.mxu0 0.0
        %830 = vmatpush1.msra.mxu0 0.0
        %831 = vmatprep.subr.mxu0 0.0
        %832 = vmatpush1.msra.mxu0 0.0
        %833 = vmatprep.subr.mxu0 0.0
        %834 = vmatpush1.msra.mxu0 0.0
        %835 = vmatprep.subr.mxu0 0.0
        %836 = vmatpush1.msra.mxu0 0.0
        %837 = vmatprep.subr.mxu0 0.0
        %838 = vmatpush1.msra.mxu0 0.0
        %839 = vmatprep.subr.mxu0 0.0
        %840 = vmatpush1.msra.mxu0 0.0
        %841 = vmatprep.subr.mxu0 0.0
        %842 = vmatpush1.msra.mxu0 0.0
        %843 = vmatprep.subr.mxu0 0.0
        %844 = vmatpush1.msra.mxu0 0.0
        %845 = vmatprep.subr.mxu0 0.0
        %846 = vmatpush1.msra.mxu0 0.0
        %847 = vmatprep.subr.mxu0 0.0
        %848 = vmatpush1.msra.mxu0 0.0
        %849 = vmatprep.subr.mxu0 0.0
        %850 = vmatpush1.msra.mxu0 0.0
        %851 = vmatprep.subr.mxu0 0.0
        %852 = vmatpush1.msra.mxu0 0.0
        %853 = vmatprep.mubr.f32.mxu0 0.0
        %854 = vmatmul.mubr.f32.gmra.mrb[0].mxu0 %v787
        %v855 = vpop.f32.mrb[0].mxu0
        %v856 = vadd.f32 0.0, %v855
        %v857 = vpop.f32.mrb[0].mxu0
        %v858 = vadd.f32 0.0, %v857
        %859 = vdwg.mxu0
        %860 = vmatprep.subr.mxu0 0.0
        %861 = vmatpush1.msra.mxu0 %v758
        %862 = vmatprep.subr.mxu0 0.0
        %863 = vmatpush1.msra.mxu0 %v761
        %864 = vmatprep.subr.mxu0 0.0
        %865 = vmatpush1.msra.mxu0 %v764
        %866 = vmatprep.subr.mxu0 0.0
        %867 = vmatpush1.msra.mxu0 %v767
        %868 = vmatprep.subr.mxu0 0.0
        %869 = vmatpush1.msra.mxu0 %v770
        %870 = vmatprep.subr.mxu0 0.0
        %871 = vmatpush1.msra.mxu0 %v773
        %872 = vmatprep.subr.mxu0 0.0
        %873 = vmatpush1.msra.mxu0 %v776
        %874 = vmatprep.subr.mxu0 0.0
        %875 = vmatpush1.msra.mxu0 %v779
        %876 = vmatprep.subr.mxu0 0.0
        %877 = vmatpush1.msra.mxu0 %v782
        %878 = vmatprep.subr.mxu0 0.0
        %879 = vmatpush1.msra.mxu0 %v785
        %880 = vmatprep.subr.mxu0 0.0
        %881 = vmatpush1.msra.mxu0 0.0
        %882 = vmatprep.subr.mxu0 0.0
        %883 = vmatpush1.msra.mxu0 0.0
        %884 = vmatprep.subr.mxu0 0.0
        %885 = vmatpush1.msra.mxu0 0.0
        %886 = vmatprep.subr.mxu0 0.0
        %887 = vmatpush1.msra.mxu0 0.0
        %888 = vmatprep.subr.mxu0 0.0
        %889 = vmatpush1.msra.mxu0 0.0
        %890 = vmatprep.subr.mxu0 0.0
        %891 = vmatpush1.msra.mxu0 0.0
        %892 = vmatprep.subr.mxu0 0.0
        %893 = vmatpush1.msra.mxu0 0.0
        %894 = vmatprep.subr.mxu0 0.0
        %895 = vmatpush1.msra.mxu0 0.0
        %896 = vmatprep.subr.mxu0 0.0
        %897 = vmatpush1.msra.mxu0 0.0
        %898 = vmatprep.subr.mxu0 0.0
        %899 = vmatpush1.msra.mxu0 0.0
        %900 = vmatprep.subr.mxu0 0.0
        %901 = vmatpush1.msra.mxu0 0.0
        %902 = vmatprep.subr.mxu0 0.0
        %903 = vmatpush1.msra.mxu0 0.0
        %904 = vmatprep.subr.mxu0 0.0
        %905 = vmatpush1.msra.mxu0 0.0
        %906 = vmatprep.subr.mxu0 0.0
        %907 = vmatpush1.msra.mxu0 0.0
        %908 = vmatprep.subr.mxu0 0.0
        %909 = vmatpush1.msra.mxu0 0.0
        %910 = vmatprep.subr.mxu0 0.0
        %911 = vmatpush1.msra.mxu0 0.0
        %912 = vmatprep.subr.mxu0 0.0
        %913 = vmatpush1.msra.mxu0 0.0
        %914 = vmatprep.subr.mxu0 0.0
        %915 = vmatpush1.msra.mxu0 0.0
        %916 = vmatprep.subr.mxu0 0.0
        %917 = vmatpush1.msra.mxu0 0.0
        %918 = vmatprep.subr.mxu0 0.0
        %919 = vmatpush1.msra.mxu0 0.0
        %920 = vmatprep.subr.mxu0 0.0
        %921 = vmatpush1.msra.mxu0 0.0
        %922 = vmatprep.subr.mxu0 0.0
        %923 = vmatpush1.msra.mxu0 0.0
        %924 = vmatprep.mubr.f32.mxu0 0.0
        %925 = vmatmul.mubr.f32.gmra.mrb[0].mxu0 %v787
        %v926 = vpop.f32.mrb[0].mxu0
        %v927 = vadd.f32 0.0, %v926
        %v928 = vpop.f32.mrb[0].mxu0
        %929 = vdwg.mxu0
        %930 = vst [vmem:[#allocation3] sm:$0xff] %v856
        %931 = vst [vmem:[#allocation3 + $0x8] sm:$0xff] %v858
        %vm932 = vcmask 572416
        %933 = vst.msk [vmem:[#allocation3 + $0x10] sm:$0xff] %vm932, %v927
        %v934 = vld [vmem:[%s445] sm:$0xff]
        %v935 = vld [vmem:[%s9] sm:$0xff]
        %v936 = vld [vmem:[%s9 + $0x8] sm:$0xff]
        %v937 = vld [vmem:[%s9 + $0x10] sm:$0xff]
        %v938 = vld [vmem:[%s9 + $0x18] sm:$0xff]
        %v939 = vld [vmem:[%s9 + $0x20] sm:$0xff]
        %v940 = vld [vmem:[%s9 + $0x28] sm:$0xff]
        %v941 = vld [vmem:[%s9 + $0x30] sm:$0xff]
        %v942 = vld [vmem:[%s9 + $0x38] sm:$0xff]
        %v943 = vld [vmem:[%s9 + $0x40] sm:$0xff]
        %v944 = vld [vmem:[%s9 + $0x48] sm:$0xff]
        %v945 = vld [vmem:[%s9 + $0x50] sm:$0xff]
        %v946 = vld [vmem:[%s9 + $0x58] sm:$0xff]
        %v947 = vld [vmem:[%s9 + $0x60] sm:$0xff]
        %v948 = vld [vmem:[%s9 + $0x68] sm:$0xff]
        %v949 = vld [vmem:[%s9 + $0x70] sm:$0xff]
        %v950 = vld [vmem:[%s9 + $0x78] sm:$0xff]
        %v951 = vld [vmem:[%s9 + $0x80] sm:$0xff]
        %v952 = vld [vmem:[%s9 + $0x88] sm:$0xff]
        %v953 = vld [vmem:[%s9 + $0x90] sm:$0xff]
        %v954 = vld [vmem:[%s9 + $0x98] sm:$0xff]
        %v955 = vld [vmem:[%s9 + $0xa0] sm:$0xff]
        %v956 = vld [vmem:[%s9 + $0xa8] sm:$0xff]
        %v957 = vld [vmem:[%s9 + $0xb0] sm:$0xff]
        %v958 = vld [vmem:[%s9 + $0xb8] sm:$0xff]
        %v959 = vld [vmem:[%s9 + $0xc0] sm:$0xff]
        %v960 = vld [vmem:[%s9 + $0xc8] sm:$0xff]
        %v961 = vld [vmem:[%s9 + $0xd0] sm:$0xff]
        %v962 = vld [vmem:[%s9 + $0xd8] sm:$0xff]
        %v963 = vld [vmem:[%s9 + $0xe0] sm:$0xff]
        %v964 = vld [vmem:[%s9 + $0xe8] sm:$0xff]
        %v965 = vld [vmem:[%s9 + $0xf0] sm:$0xff]
        %v966 = vld [vmem:[%s9 + $0xf8] sm:$0xff]
        %v967 = vld [vmem:[%s9 + $0x100] sm:$0xff]
        %v968 = vld [vmem:[%s9 + $0x108] sm:$0xff]
        %v969 = vld [vmem:[%s9 + $0x110] sm:$0xff]
        %v970 = vld [vmem:[%s9 + $0x118] sm:$0xff]
        %v971 = vld [vmem:[%s9 + $0x120] sm:$0xff]
        %v972 = vld [vmem:[%s9 + $0x128] sm:$0xff]
        %v973 = vld [vmem:[%s9 + $0x130] sm:$0xff]
        %v974 = vld [vmem:[%s9 + $0x138] sm:$0xff]
        %v975 = vld [vmem:[%s9 + $0x140] sm:$0xff]
        %v976 = vld [vmem:[%s9 + $0x148] sm:$0xff]
        %v977 = vld [vmem:[%s9 + $0x150] sm:$0xff]
        %v978 = vld [vmem:[%s9 + $0x158] sm:$0xff]
        %v979 = vld [vmem:[%s9 + $0x160] sm:$0xff]
        %v980 = vld [vmem:[%s9 + $0x168] sm:$0xff]
        %v981 = vld [vmem:[%s9 + $0x170] sm:$0xff]
        %v982 = vld [vmem:[%s9 + $0x178] sm:$0xff]
        %v983 = vld [vmem:[%s9 + $0x180] sm:$0xff]
        %v984 = vld [vmem:[%s9 + $0x188] sm:$0xff]
        %v985 = vld [vmem:[%s9 + $0x190] sm:$0xff]
        %v986 = vld [vmem:[%s9 + $0x198] sm:$0xff]
        %v987 = vld [vmem:[%s9 + $0x1a0] sm:$0xff]
        %v988 = vld [vmem:[%s9 + $0x1a8] sm:$0xff]
        %v989 = vld [vmem:[%s9 + $0x1b0] sm:$0xff]
        %v990 = vld [vmem:[%s9 + $0x1b8] sm:$0xff]
        %v991 = vld [vmem:[%s9 + $0x1c0] sm:$0xff]
        %v992 = vld [vmem:[%s9 + $0x1c8] sm:$0xff]
        %v993 = vld [vmem:[%s9 + $0x1d0] sm:$0xff]
        %v994 = vld [vmem:[%s9 + $0x1d8] sm:$0xff]
        %v995 = vld [vmem:[%s9 + $0x1e0] sm:$0xff]
        %v996 = vld [vmem:[%s9 + $0x1e8] sm:$0xff]
        %v997 = vld [vmem:[%s9 + $0x1f0] sm:$0xff]
        %v998 = vld [vmem:[%s9 + $0x1f8] sm:$0xff]
        %v999 = vld [vmem:[%s9 + $0x200] sm:$0xff]
        %v1000 = vld [vmem:[%s9 + $0x208] sm:$0xff]
        %v1001 = vld [vmem:[%s9 + $0x210] sm:$0xff]
        %v1002 = vld [vmem:[%s9 + $0x218] sm:$0xff]
        %v1003 = vld [vmem:[%s9 + $0x220] sm:$0xff]
        %v1004 = vld [vmem:[%s9 + $0x228] sm:$0xff]
        %v1005 = vld [vmem:[%s9 + $0x230] sm:$0xff]
        %v1006 = vld [vmem:[%s9 + $0x238] sm:$0xff]
        %v1007 = vld [vmem:[%s9 + $0x240] sm:$0xff]
        %v1008 = vld [vmem:[%s9 + $0x248] sm:$0xff]
        %v1009 = vld [vmem:[%s9 + $0x250] sm:$0xff]
        %v1010 = vld [vmem:[%s9 + $0x258] sm:$0xff]
        %v1011 = vld [vmem:[%s9 + $0x260] sm:$0xff]
        %v1012 = vld [vmem:[%s9 + $0x268] sm:$0xff]
        %v1013 = vld [vmem:[%s9 + $0x270] sm:$0xff]
        %v1014 = vld [vmem:[%s9 + $0x278] sm:$0xff]
        %v1015 = vld [vmem:[%s9 + $0x280] sm:$0xff]
        %v1016 = vld [vmem:[%s9 + $0x288] sm:$0xff]
        %v1017 = vld [vmem:[%s9 + $0x290] sm:$0xff]
        %v1018 = vld [vmem:[%s9 + $0x298] sm:$0xff]
        %v1019 = vld [vmem:[%s9 + $0x2a0] sm:$0xff]
        %v1020 = vld [vmem:[%s9 + $0x2a8] sm:$0xff]
        %v1021 = vld [vmem:[%s9 + $0x2b0] sm:$0xff]
        %v1022 = vld [vmem:[%s9 + $0x2b8] sm:$0xff]
        %v1023 = vld [vmem:[%s9 + $0x2c0] sm:$0xff]
        %v1024 = vld [vmem:[%s9 + $0x2c8] sm:$0xff]
        %v1025 = vld [vmem:[%s9 + $0x2d0] sm:$0xff]
        %v1026 = vld [vmem:[%s9 + $0x2d8] sm:$0xff]
        %v1027 = vld [vmem:[%s9 + $0x2e0] sm:$0xff]
        %v1028 = vld [vmem:[%s9 + $0x2e8] sm:$0xff]
        %v1029 = vld [vmem:[%s9 + $0x2f0] sm:$0xff]
        %v1030 = vld [vmem:[%s9 + $0x2f8] sm:$0xff]
        %v1032 = vcombine.high %v934, %v934
        %1034 = vmatprep.subr.mxu0 %v936
        %1035 = vmatpush1.msra.mxu0 %v935
        %1036 = vmatprep.subr.mxu0 %v939
        %1037 = vmatpush1.msra.mxu0 %v938
        %1038 = vmatprep.subr.mxu0 %v942
        %1039 = vmatpush1.msra.mxu0 %v941
        %1040 = vmatprep.subr.mxu0 %v945
        %1041 = vmatpush1.msra.mxu0 %v944
        %1042 = vmatprep.subr.mxu0 %v948
        %1043 = vmatpush1.msra.mxu0 %v947
        %1044 = vmatprep.subr.mxu0 %v951
        %1045 = vmatpush1.msra.mxu0 %v950
        %1046 = vmatprep.subr.mxu0 %v954
        %1047 = vmatpush1.msra.mxu0 %v953
        %1048 = vmatprep.subr.mxu0 %v957
        %1049 = vmatpush1.msra.mxu0 %v956
        %1050 = vmatprep.subr.mxu0 %v960
        %1051 = vmatpush1.msra.mxu0 %v959
        %1052 = vmatprep.subr.mxu0 %v963
        %1053 = vmatpush1.msra.mxu0 %v962
        %1054 = vmatprep.subr.mxu0 %v966
        %1055 = vmatpush1.msra.mxu0 %v965
        %1056 = vmatprep.subr.mxu0 %v969
        %1057 = vmatpush1.msra.mxu0 %v968
        %1058 = vmatprep.subr.mxu0 %v972
        %1059 = vmatpush1.msra.mxu0 %v971
        %1060 = vmatprep.subr.mxu0 %v975
        %1061 = vmatpush1.msra.mxu0 %v974
        %1062 = vmatprep.subr.mxu0 %v978
        %1063 = vmatpush1.msra.mxu0 %v977
        %1064 = vmatprep.subr.mxu0 %v981
        %1065 = vmatpush1.msra.mxu0 %v980
        %1066 = vmatprep.subr.mxu0 %v984
        %1067 = vmatpush1.msra.mxu0 %v983
        %1068 = vmatprep.subr.mxu0 %v987
        %1069 = vmatpush1.msra.mxu0 %v986
        %1070 = vmatprep.subr.mxu0 %v990
        %1071 = vmatpush1.msra.mxu0 %v989
        %1072 = vmatprep.subr.mxu0 %v993
        %1073 = vmatpush1.msra.mxu0 %v992
        %1074 = vmatprep.subr.mxu0 %v996
        %1075 = vmatpush1.msra.mxu0 %v995
        %1076 = vmatprep.subr.mxu0 %v999
        %1077 = vmatpush1.msra.mxu0 %v998
        %1078 = vmatprep.subr.mxu0 %v1002
        %1079 = vmatpush1.msra.mxu0 %v1001
        %1080 = vmatprep.subr.mxu0 %v1005
        %1081 = vmatpush1.msra.mxu0 %v1004
        %1082 = vmatprep.subr.mxu0 %v1008
        %1083 = vmatpush1.msra.mxu0 %v1007
        %1084 = vmatprep.subr.mxu0 %v1011
        %1085 = vmatpush1.msra.mxu0 %v1010
        %1086 = vmatprep.subr.mxu0 %v1014
        %1087 = vmatpush1.msra.mxu0 %v1013
        %1088 = vmatprep.subr.mxu0 %v1017
        %1089 = vmatpush1.msra.mxu0 %v1016
        %1090 = vmatprep.subr.mxu0 %v1020
        %1091 = vmatpush1.msra.mxu0 %v1019
        %1092 = vmatprep.subr.mxu0 %v1023
        %1093 = vmatpush1.msra.mxu0 %v1022
        %1094 = vmatprep.subr.mxu0 %v1026
        %1095 = vmatpush1.msra.mxu0 %v1025
        %1096 = vmatprep.subr.mxu0 %v1029
        %1097 = vmatpush1.msra.mxu0 %v1028
        %1098 = vmatprep.mubr.f32.mxu0 %v1032
        %1099 = vmatmul.mubr.f32.gmra.mrb[0].mxu0 %v934
        %v1100 = vpop.f32.mrb[0].mxu0
        %v1101 = vadd.f32 0.0, %v1100
        %v1102 = vpop.f32.mrb[0].mxu0
        %v1103 = vadd.f32 0.0, %v1102
        %1104 = vdwg.mxu0
        %1105 = vmatprep.subr.mxu0 0.0
        %1106 = vmatpush1.msra.mxu0 %v937
        %1107 = vmatprep.subr.mxu0 0.0
        %1108 = vmatpush1.msra.mxu0 %v940
        %1109 = vmatprep.subr.mxu0 0.0
        %1110 = vmatpush1.msra.mxu0 %v943
        %1111 = vmatprep.subr.mxu0 0.0
        %1112 = vmatpush1.msra.mxu0 %v946
        %1113 = vmatprep.subr.mxu0 0.0
        %1114 = vmatpush1.msra.mxu0 %v949
        %1115 = vmatprep.subr.mxu0 0.0
        %1116 = vmatpush1.msra.mxu0 %v952
        %1117 = vmatprep.subr.mxu0 0.0
        %1118 = vmatpush1.msra.mxu0 %v955
        %1119 = vmatprep.subr.mxu0 0.0
        %1120 = vmatpush1.msra.mxu0 %v958
        %1121 = vmatprep.subr.mxu0 0.0
        %1122 = vmatpush1.msra.mxu0 %v961
        %1123 = vmatprep.subr.mxu0 0.0
        %1124 = vmatpush1.msra.mxu0 %v964
        %1125 = vmatprep.subr.mxu0 0.0
        %1126 = vmatpush1.msra.mxu0 %v967
        %1127 = vmatprep.subr.mxu0 0.0
        %1128 = vmatpush1.msra.mxu0 %v970
        %1129 = vmatprep.subr.mxu0 0.0
        %1130 = vmatpush1.msra.mxu0 %v973
        %1131 = vmatprep.subr.mxu0 0.0
        %1132 = vmatpush1.msra.mxu0 %v976
        %1133 = vmatprep.subr.mxu0 0.0
        %1134 = vmatpush1.msra.mxu0 %v979
        %1135 = vmatprep.subr.mxu0 0.0
        %1136 = vmatpush1.msra.mxu0 %v982
        %1137 = vmatprep.subr.mxu0 0.0
        %1138 = vmatpush1.msra.mxu0 %v985
        %1139 = vmatprep.subr.mxu0 0.0
        %1140 = vmatpush1.msra.mxu0 %v988
        %1141 = vmatprep.subr.mxu0 0.0
        %1142 = vmatpush1.msra.mxu0 %v991
        %1143 = vmatprep.subr.mxu0 0.0
        %1144 = vmatpush1.msra.mxu0 %v994
        %1145 = vmatprep.subr.mxu0 0.0
        %1146 = vmatpush1.msra.mxu0 %v997
        %1147 = vmatprep.subr.mxu0 0.0
        %1148 = vmatpush1.msra.mxu0 %v1000
        %1149 = vmatprep.subr.mxu0 0.0
        %1150 = vmatpush1.msra.mxu0 %v1003
        %1151 = vmatprep.subr.mxu0 0.0
        %1152 = vmatpush1.msra.mxu0 %v1006
        %1153 = vmatprep.subr.mxu0 0.0
        %1154 = vmatpush1.msra.mxu0 %v1009
        %1155 = vmatprep.subr.mxu0 0.0
        %1156 = vmatpush1.msra.mxu0 %v1012
        %1157 = vmatprep.subr.mxu0 0.0
        %1158 = vmatpush1.msra.mxu0 %v1015
        %1159 = vmatprep.subr.mxu0 0.0
        %1160 = vmatpush1.msra.mxu0 %v1018
        %1161 = vmatprep.subr.mxu0 0.0
        %1162 = vmatpush1.msra.mxu0 %v1021
        %1163 = vmatprep.subr.mxu0 0.0
        %1164 = vmatpush1.msra.mxu0 %v1024
        %1165 = vmatprep.subr.mxu0 0.0
        %1166 = vmatpush1.msra.mxu0 %v1027
        %1167 = vmatprep.subr.mxu0 0.0
        %1168 = vmatpush1.msra.mxu0 %v1030
        %1169 = vmatprep.mubr.f32.mxu0 %v1032
        %1170 = vmatmul.mubr.f32.gmra.mrb[0].mxu0 %v934
        %v1171 = vpop.f32.mrb[0].mxu0
        %v1172 = vadd.f32 0.0, %v1171
        %v1173 = vpop.f32.mrb[0].mxu0
        %1174 = vdwg.mxu0
        %1175 = vst [vmem:[#allocation3 + $0x18] sm:$0xf] %v1101
        %1176 = vst [vmem:[#allocation3 + $0x20] sm:$0xf] %v1103
        %vm1177 = vcmask 568320
        %1178 = vst.msk [vmem:[#allocation3 + $0x28] sm:$0xf] %vm1177, %v1172
        %v1179 = vld [vmem:[#allocation3] sm:$0xff]
        %v1180 = vld [vmem:[#allocation3 + $0x8] sm:$0xff]
        %v1181 = vld [vmem:[#allocation3 + $0x10] sm:$0xff]
        %v1182 = vld [vmem:[#allocation3 + $0x18] sm:$0xf]
        %v1183 = vld [vmem:[#allocation3 + $0x20] sm:$0xf]
        %v1184 = vld [vmem:[#allocation3 + $0x28] sm:$0xf]
        %1185 = vst [vmem:[#allocation5] sm:$0xff] %v1179
        %1186 = vst [vmem:[#allocation5 + $0x8] sm:$0xff] %v1180
        %vm1187 = vcmask 261120
        %1188 = vst.msk [vmem:[#allocation5 + $0x10] sm:$0xff] %vm1187, %v1181
        %1189 = vst [vmem:[#allocation5 + $0x18] sm:$0xf] %v1182
        %1190 = vst [vmem:[#allocation5 + $0x20] sm:$0xf] %v1183
        %vm1191 = vcmask 257024
        %1192 = vst.msk [vmem:[#allocation5 + $0x28] sm:$0xf] %vm1191, %v1184
        %v1193 = vld [vmem:[#allocation3] sm:$0xff]
        %v1194 = vld [vmem:[#allocation3 + $0x8] sm:$0xff]
        %v1195 = vld [vmem:[#allocation3 + $0x10] sm:$0xff]
        %v1196 = vld [vmem:[#allocation3 + $0x18] sm:$0xf]
        %v1197 = vld [vmem:[#allocation3 + $0x20] sm:$0xf]
        %v1198 = vld [vmem:[#allocation3 + $0x28] sm:$0xf]
        %vm1205 = vcmask 1043456
        %v1206 = vrot.slane %v1193, 4
        %v1207 = vrot.slane %v1194, 4
        %v1208 = vrot.slane %v1195, 4
        %v1209 = vrot.slane %v1196, 4
        %v1210 = vsel %vm1205, %v1206, %v1209
        %v1211 = vrot.slane %v1197, 4
        %v1212 = vsel %vm1205, %v1207, %v1211
        %v1213 = vrot.slane %v1198, 4
        %v1214 = vsel %vm1205, %v1208, %v1213
        %1215 = vrot.lane.b32.xlu0 %v1206, 127
        %v1216 = vpop.permute.xlu0 %1215
        %1217 = vrot.lane.b32.xlu0 %v1207, 127
        %v1218 = vpop.permute.xlu0 %1217
        %1219 = vrot.lane.b32.xlu0 %v1208, 127
        %v1220 = vpop.permute.xlu0 %1219
        %1221 = vrot.lane.b32.xlu0 %v1210, 127
        %v1222 = vpop.permute.xlu0 %1221
        %1223 = vrot.lane.b32.xlu0 %v1212, 127
        %v1224 = vpop.permute.xlu0 %1223
        %1225 = vrot.lane.b32.xlu0 %v1214, 127
        %v1226 = vpop.permute.xlu0 %1225
        %vm1227 = vcmask 1039360
        %v1228 = vsel %vm1227, %v1216, %v1218
        %v1229 = vsel %vm1227, %v1218, %v1220
        %v1230 = vsel %vm1227, %v1222, %v1224
        %v1231 = vsel %vm1227, %v1224, %v1226
        %1238 = vst [vmem:[#allocation5 + $0x18] sm:$0xf0] %v1228
        %1239 = vst [vmem:[#allocation5 + $0x20] sm:$0xf0] %v1229
        %vm1240 = vcmask 261124
        %1241 = vst.msk [vmem:[#allocation5 + $0x28] sm:$0xf0] %vm1240, %v1220
        %1242 = vst [vmem:[#allocation5 + $0x30] sm:$0xff] %v1230
        %1243 = vst [vmem:[#allocation5 + $0x38] sm:$0xff] %v1231
        %1244 = vst.msk [vmem:[#allocation5 + $0x40] sm:$0xff] %vm1187, %v1226
        %v1245 = vld [vmem:[#allocation3] sm:$0xff]
        %v1246 = vld [vmem:[#allocation3 + $0x8] sm:$0xff]
        %v1247 = vld [vmem:[#allocation3 + $0x10] sm:$0xff]
        %v1248 = vld [vmem:[#allocation3 + $0x18] sm:$0xf]
        %v1249 = vld [vmem:[#allocation3 + $0x20] sm:$0xf]
        %v1250 = vld [vmem:[#allocation3 + $0x28] sm:$0xf]
        %1257 = vrot.lane.b32.xlu0 %v1245, 126
        %v1258 = vpop.permute.xlu0 %1257
        %1259 = vrot.lane.b32.xlu0 %v1246, 126
        %v1260 = vpop.permute.xlu0 %1259
        %1261 = vrot.lane.b32.xlu0 %v1247, 126
        %v1262 = vpop.permute.xlu0 %1261
        %1263 = vrot.lane.b32.xlu0 %v1248, 126
        %v1264 = vpop.permute.xlu0 %1263
        %1265 = vrot.lane.b32.xlu0 %v1249, 126
        %v1266 = vpop.permute.xlu0 %1265
        %1267 = vrot.lane.b32.xlu0 %v1250, 126
        %v1268 = vpop.permute.xlu0 %1267
        %vm1269 = vcmask 1031168
        %v1270 = vsel %vm1269, %v1258, %v1260
        %v1271 = vsel %vm1269, %v1260, %v1262
        %v1272 = vsel %vm1269, %v1264, %v1266
        %v1273 = vsel %vm1269, %v1266, %v1268
        %1280 = vst [vmem:[#allocation5 + $0x48] sm:$0xff] %v1270
        %1281 = vst [vmem:[#allocation5 + $0x50] sm:$0xff] %v1271
        %1282 = vst.msk [vmem:[#allocation5 + $0x58] sm:$0xff] %vm1187, %v1262
        %1283 = vst [vmem:[#allocation5 + $0x60] sm:$0xf] %v1272
        %1284 = vst [vmem:[#allocation5 + $0x68] sm:$0xf] %v1273
        %1285 = vst.msk [vmem:[#allocation5 + $0x70] sm:$0xf] %vm1191, %v1268
        %v1286 = vld [vmem:[#allocation3] sm:$0xff]
        %v1287 = vld [vmem:[#allocation3 + $0x8] sm:$0xff]
        %v1288 = vld [vmem:[#allocation3 + $0x10] sm:$0xff]
        %v1289 = vld [vmem:[#allocation3 + $0x18] sm:$0xf]
        %v1290 = vld [vmem:[#allocation3 + $0x20] sm:$0xf]
        %v1291 = vld [vmem:[#allocation3 + $0x28] sm:$0xf]
        %v1298 = vrot.slane %v1286, 4
        %v1299 = vrot.slane %v1287, 4
        %v1300 = vrot.slane %v1288, 4
        %v1301 = vrot.slane %v1289, 4
        %v1302 = vsel %vm1205, %v1298, %v1301
        %v1303 = vrot.slane %v1290, 4
        %v1304 = vsel %vm1205, %v1299, %v1303
        %v1305 = vrot.slane %v1291, 4
        %v1306 = vsel %vm1205, %v1300, %v1305
        %1307 = vrot.lane.b32.xlu0 %v1298, 110
        %v1308 = vpop.permute.xlu0 %1307
        %1309 = vrot.lane.b32.xlu0 %v1299, 110
        %v1310 = vpop.permute.xlu0 %1309
        %1311 = vrot.lane.b32.xlu0 %v1300, 110
        %v1312 = vpop.permute.xlu0 %1311
        %1313 = vrot.lane.b32.xlu0 %v1302, 110
        %v1314 = vpop.permute.xlu0 %1313
        %1315 = vrot.lane.b32.xlu0 %v1304, 110
        %v1316 = vpop.permute.xlu0 %1315
        %1317 = vrot.lane.b32.xlu0 %v1306, 110
        %v1318 = vpop.permute.xlu0 %1317
        %vm1319 = vcmask 900096
        %v1320 = vsel %vm1319, %v1308, %v1310
        %v1321 = vsel %vm1319, %v1310, %v1312
        %v1322 = vsel %vm1319, %v1314, %v1316
        %v1323 = vsel %vm1319, %v1316, %v1318
        %1330 = vst [vmem:[#allocation5 + $0x60] sm:$0xf0] %v1320
        %1331 = vst [vmem:[#allocation5 + $0x68] sm:$0xf0] %v1321
        %1332 = vst.msk [vmem:[#allocation5 + $0x70] sm:$0xf0] %vm1240, %v1312
        %1333 = vst [vmem:[#allocation5 + $0x78] sm:$0xff] %v1322
        %1334 = vst [vmem:[#allocation5 + $0x80] sm:$0xff] %v1323
        %1335 = vst.msk [vmem:[#allocation5 + $0x88] sm:$0xff] %vm1187, %v1318
        %v1336 = vld [vmem:[#allocation3] sm:$0xff]
        %v1337 = vld [vmem:[#allocation3 + $0x8] sm:$0xff]
        %v1338 = vld [vmem:[#allocation3 + $0x10] sm:$0xff]
        %v1339 = vld [vmem:[#allocation3 + $0x18] sm:$0xf]
        %v1340 = vld [vmem:[#allocation3 + $0x20] sm:$0xf]
        %v1341 = vld [vmem:[#allocation3 + $0x28] sm:$0xf]
        %1348 = vrot.lane.b32.xlu0 %v1336, 109
        %v1349 = vpop.permute.xlu0 %1348
        %1350 = vrot.lane.b32.xlu0 %v1337, 109
        %v1351 = vpop.permute.xlu0 %1350
        %1352 = vrot.lane.b32.xlu0 %v1338, 109
        %v1353 = vpop.permute.xlu0 %1352
        %1354 = vrot.lane.b32.xlu0 %v1339, 109
        %v1355 = vpop.permute.xlu0 %1354
        %1356 = vrot.lane.b32.xlu0 %v1340, 109
        %v1357 = vpop.permute.xlu0 %1356
        %1358 = vrot.lane.b32.xlu0 %v1341, 109
        %v1359 = vpop.permute.xlu0 %1358
        %vm1360 = vcmask 891904
        %v1361 = vsel %vm1360, %v1349, %v1351
        %v1362 = vsel %vm1360, %v1351, %v1353
        %v1363 = vsel %vm1360, %v1355, %v1357
        %v1364 = vsel %vm1360, %v1357, %v1359
        %1371 = vst [vmem:[#allocation5 + $0x90] sm:$0xff] %v1361
        %1372 = vst [vmem:[#allocation5 + $0x98] sm:$0xff] %v1362
        %1373 = vst.msk [vmem:[#allocation5 + $0xa0] sm:$0xff] %vm1187, %v1353
        %1374 = vst [vmem:[#allocation5 + $0xa8] sm:$0xf] %v1363
        %1375 = vst [vmem:[#allocation5 + $0xb0] sm:$0xf] %v1364
        %1376 = vst.msk [vmem:[#allocation5 + $0xb8] sm:$0xf] %vm1191, %v1359
        %v1377 = vld [vmem:[#allocation3] sm:$0xff]
        %v1378 = vld [vmem:[#allocation3 + $0x8] sm:$0xff]
        %v1379 = vld [vmem:[#allocation3 + $0x10] sm:$0xff]
        %v1380 = vld [vmem:[#allocation3 + $0x18] sm:$0xf]
        %v1381 = vld [vmem:[#allocation3 + $0x20] sm:$0xf]
        %v1382 = vld [vmem:[#allocation3 + $0x28] sm:$0xf]
        %v1389 = vrot.slane %v1377, 4
        %v1390 = vrot.slane %v1378, 4
        %v1391 = vrot.slane %v1379, 4
        %v1392 = vrot.slane %v1380, 4
        %v1393 = vsel %vm1205, %v1389, %v1392
        %v1394 = vrot.slane %v1381, 4
        %v1395 = vsel %vm1205, %v1390, %v1394
        %v1396 = vrot.slane %v1382, 4
        %v1397 = vsel %vm1205, %v1391, %v1396
        %1398 = vrot.lane.b32.xlu0 %v1389, 108
        %v1399 = vpop.permute.xlu0 %1398
        %1400 = vrot.lane.b32.xlu0 %v1390, 108
        %v1401 = vpop.permute.xlu0 %1400
        %1402 = vrot.lane.b32.xlu0 %v1391, 108
        %v1403 = vpop.permute.xlu0 %1402
        %1404 = vrot.lane.b32.xlu0 %v1393, 108
        %v1405 = vpop.permute.xlu0 %1404
        %1406 = vrot.lane.b32.xlu0 %v1395, 108
        %v1407 = vpop.permute.xlu0 %1406
        %1408 = vrot.lane.b32.xlu0 %v1397, 108
        %v1409 = vpop.permute.xlu0 %1408
        %vm1410 = vcmask 883712
        %v1411 = vsel %vm1410, %v1399, %v1401
        %v1412 = vsel %vm1410, %v1401, %v1403
        %v1413 = vsel %vm1410, %v1405, %v1407
        %v1414 = vsel %vm1410, %v1407, %v1409
        %1421 = vst [vmem:[#allocation5 + $0xa8] sm:$0xf0] %v1411
        %1422 = vst [vmem:[#allocation5 + $0xb0] sm:$0xf0] %v1412
        %1423 = vst.msk [vmem:[#allocation5 + $0xb8] sm:$0xf0] %vm1240, %v1403
        %1424 = vst [vmem:[#allocation5 + $0xc0] sm:$0xff] %v1413
        %1425 = vst [vmem:[#allocation5 + $0xc8] sm:$0xff] %v1414
        %1426 = vst.msk [vmem:[#allocation5 + $0xd0] sm:$0xff] %vm1187, %v1409
        %v1427 = vld [vmem:[#allocation3] sm:$0xff]
        %v1428 = vld [vmem:[#allocation3 + $0x8] sm:$0xff]
        %v1429 = vld [vmem:[#allocation3 + $0x10] sm:$0xff]
        %v1430 = vld [vmem:[#allocation3 + $0x18] sm:$0xf]
        %v1431 = vld [vmem:[#allocation3 + $0x20] sm:$0xf]
        %v1432 = vld [vmem:[#allocation3 + $0x28] sm:$0xf]
        %1439 = vrot.lane.b32.xlu0 %v1427, 92
        %v1440 = vpop.permute.xlu0 %1439
        %1441 = vrot.lane.b32.xlu0 %v1428, 92
        %v1442 = vpop.permute.xlu0 %1441
        %1443 = vrot.lane.b32.xlu0 %v1429, 92
        %v1444 = vpop.permute.xlu0 %1443
        %1445 = vrot.lane.b32.xlu0 %v1430, 92
        %v1446 = vpop.permute.xlu0 %1445
        %1447 = vrot.lane.b32.xlu0 %v1431, 92
        %v1448 = vpop.permute.xlu0 %1447
        %1449 = vrot.lane.b32.xlu0 %v1432, 92
        %v1450 = vpop.permute.xlu0 %1449
        %vm1451 = vcmask 752640
        %v1452 = vsel %vm1451, %v1440, %v1442
        %v1453 = vsel %vm1451, %v1442, %v1444
        %v1454 = vsel %vm1451, %v1446, %v1448
        %v1455 = vsel %vm1451, %v1448, %v1450
        %1462 = vst [vmem:[#allocation5 + $0xd8] sm:$0xff] %v1452
        %1463 = vst [vmem:[#allocation5 + $0xe0] sm:$0xff] %v1453
        %1464 = vst.msk [vmem:[#allocation5 + $0xe8] sm:$0xff] %vm1187, %v1444
        %1465 = vst [vmem:[#allocation5 + $0xf0] sm:$0xf] %v1454
        %1466 = vst [vmem:[#allocation5 + $0xf8] sm:$0xf] %v1455
        %1467 = vst.msk [vmem:[#allocation5 + $0x100] sm:$0xf] %vm1191, %v1450
        %v1468 = vld [vmem:[#allocation3] sm:$0xff]
        %v1469 = vld [vmem:[#allocation3 + $0x8] sm:$0xff]
        %v1470 = vld [vmem:[#allocation3 + $0x10] sm:$0xff]
        %v1471 = vld [vmem:[#allocation3 + $0x18] sm:$0xf]
        %v1472 = vld [vmem:[#allocation3 + $0x20] sm:$0xf]
        %v1473 = vld [vmem:[#allocation3 + $0x28] sm:$0xf]
        %v1480 = vrot.slane %v1468, 4
        %v1481 = vrot.slane %v1469, 4
        %v1482 = vrot.slane %v1470, 4
        %v1483 = vrot.slane %v1471, 4
        %v1484 = vsel %vm1205, %v1480, %v1483
        %v1485 = vrot.slane %v1472, 4
        %v1486 = vsel %vm1205, %v1481, %v1485
        %v1487 = vrot.slane %v1473, 4
        %v1488 = vsel %vm1205, %v1482, %v1487
        %1489 = vrot.lane.b32.xlu0 %v1480, 91
        %v1490 = vpop.permute.xlu0 %1489
        %1491 = vrot.lane.b32.xlu0 %v1481, 91
        %v1492 = vpop.permute.xlu0 %1491
        %1493 = vrot.lane.b32.xlu0 %v1482, 91
        %v1494 = vpop.permute.xlu0 %1493
        %1495 = vrot.lane.b32.xlu0 %v1484, 91
        %v1496 = vpop.permute.xlu0 %1495
        %1497 = vrot.lane.b32.xlu0 %v1486, 91
        %v1498 = vpop.permute.xlu0 %1497
        %1499 = vrot.lane.b32.xlu0 %v1488, 91
        %v1500 = vpop.permute.xlu0 %1499
        %vm1501 = vcmask 744448
        %v1502 = vsel %vm1501, %v1490, %v1492
        %v1503 = vsel %vm1501, %v1492, %v1494
        %v1504 = vsel %vm1501, %v1496, %v1498
        %v1505 = vsel %vm1501, %v1498, %v1500
        %1512 = vst [vmem:[#allocation5 + $0xf0] sm:$0xf0] %v1502
        %1513 = vst [vmem:[#allocation5 + $0xf8] sm:$0xf0] %v1503
        %1514 = vst.msk [vmem:[#allocation5 + $0x100] sm:$0xf0] %vm1240, %v1494
        %1515 = vst [vmem:[#allocation5 + $0x108] sm:$0xff] %v1504
        %1516 = vst [vmem:[#allocation5 + $0x110] sm:$0xff] %v1505
        %1517 = vst.msk [vmem:[#allocation5 + $0x118] sm:$0xff] %vm1187, %v1500
        %v1518 = vld [vmem:[#allocation3] sm:$0xff]
        %v1519 = vld [vmem:[#allocation3 + $0x8] sm:$0xff]
        %v1520 = vld [vmem:[#allocation3 + $0x10] sm:$0xff]
        %v1521 = vld [vmem:[#allocation3 + $0x18] sm:$0xf]
        %v1522 = vld [vmem:[#allocation3 + $0x20] sm:$0xf]
        %v1523 = vld [vmem:[#allocation3 + $0x28] sm:$0xf]
        %1530 = vrot.lane.b32.xlu0 %v1518, 90
        %v1531 = vpop.permute.xlu0 %1530
        %1532 = vrot.lane.b32.xlu0 %v1519, 90
        %v1533 = vpop.permute.xlu0 %1532
        %1534 = vrot.lane.b32.xlu0 %v1520, 90
        %v1535 = vpop.permute.xlu0 %1534
        %1536 = vrot.lane.b32.xlu0 %v1521, 90
        %v1537 = vpop.permute.xlu0 %1536
        %1538 = vrot.lane.b32.xlu0 %v1522, 90
        %v1539 = vpop.permute.xlu0 %1538
        %1540 = vrot.lane.b32.xlu0 %v1523, 90
        %v1541 = vpop.permute.xlu0 %1540
        %vm1542 = vcmask 736256
        %v1543 = vsel %vm1542, %v1531, %v1533
        %v1544 = vsel %vm1542, %v1533, %v1535
        %v1545 = vsel %vm1542, %v1537, %v1539
        %v1546 = vsel %vm1542, %v1539, %v1541
        %1553 = vst [vmem:[#allocation5 + $0x120] sm:$0xff] %v1543
        %1554 = vst [vmem:[#allocation5 + $0x128] sm:$0xff] %v1544
        %1555 = vst.msk [vmem:[#allocation5 + $0x130] sm:$0xff] %vm1187, %v1535
        %1556 = vst [vmem:[#allocation5 + $0x138] sm:$0xf] %v1545
        %1557 = vst [vmem:[#allocation5 + $0x140] sm:$0xf] %v1546
        %1558 = vst.msk [vmem:[#allocation5 + $0x148] sm:$0xf] %vm1191, %v1541
        %v1559 = vld [vmem:[%s4] sm:$0xf]
        %v1560 = vld [vmem:[#allocation5] sm:$0xff]
        %v1561 = vld [vmem:[#allocation5 + $0x8] sm:$0xff]
        %v1562 = vld [vmem:[#allocation5 + $0x10] sm:$0xff]
        %v1563 = vld [vmem:[#allocation5 + $0x18] sm:$0xff]
        %v1564 = vld [vmem:[#allocation5 + $0x20] sm:$0xff]
        %v1565 = vld [vmem:[#allocation5 + $0x28] sm:$0xff]
        %v1566 = vld [vmem:[#allocation5 + $0x30] sm:$0xff]
        %v1567 = vld [vmem:[#allocation5 + $0x38] sm:$0xff]
        %v1568 = vld [vmem:[#allocation5 + $0x40] sm:$0xff]
        %v1569 = vld [vmem:[#allocation5 + $0x48] sm:$0xff]
        %v1570 = vld [vmem:[#allocation5 + $0x50] sm:$0xff]
        %v1571 = vld [vmem:[#allocation5 + $0x58] sm:$0xff]
        %v1572 = vld [vmem:[#allocation5 + $0x60] sm:$0xff]
        %v1573 = vld [vmem:[#allocation5 + $0x68] sm:$0xff]
        %v1574 = vld [vmem:[#allocation5 + $0x70] sm:$0xff]
        %v1575 = vld [vmem:[#allocation5 + $0x78] sm:$0xff]
        %v1576 = vld [vmem:[#allocation5 + $0x80] sm:$0xff]
        %v1577 = vld [vmem:[#allocation5 + $0x88] sm:$0xff]
        %v1578 = vld [vmem:[#allocation5 + $0x90] sm:$0xff]
        %v1579 = vld [vmem:[#allocation5 + $0x98] sm:$0xff]
        %v1580 = vld [vmem:[#allocation5 + $0xa0] sm:$0xff]
        %v1581 = vld [vmem:[#allocation5 + $0xa8] sm:$0xff]
        %v1582 = vld [vmem:[#allocation5 + $0xb0] sm:$0xff]
        %v1583 = vld [vmem:[#allocation5 + $0xb8] sm:$0xff]
        %v1584 = vld [vmem:[#allocation5 + $0xc0] sm:$0xff]
        %v1585 = vld [vmem:[#allocation5 + $0xc8] sm:$0xff]
        %v1586 = vld [vmem:[#allocation5 + $0xd0] sm:$0xff]
        %v1587 = vld [vmem:[#allocation5 + $0xd8] sm:$0xff]
        %v1588 = vld [vmem:[#allocation5 + $0xe0] sm:$0xff]
        %v1589 = vld [vmem:[#allocation5 + $0xe8] sm:$0xff]
        %v1590 = vld [vmem:[#allocation5 + $0xf0] sm:$0xff]
        %v1591 = vld [vmem:[#allocation5 + $0xf8] sm:$0xff]
        %v1592 = vld [vmem:[#allocation5 + $0x100] sm:$0xff]
        %v1593 = vld [vmem:[#allocation5 + $0x108] sm:$0xff]
        %v1594 = vld [vmem:[#allocation5 + $0x110] sm:$0xff]
        %v1595 = vld [vmem:[#allocation5 + $0x118] sm:$0xff]
        %v1596 = vld [vmem:[#allocation5 + $0x120] sm:$0xff]
        %v1597 = vld [vmem:[#allocation5 + $0x128] sm:$0xff]
        %v1598 = vld [vmem:[#allocation5 + $0x130] sm:$0xff]
        %v1599 = vld [vmem:[#allocation5 + $0x138] sm:$0xf]
        %v1600 = vld [vmem:[#allocation5 + $0x140] sm:$0xf]
        %v1601 = vld [vmem:[#allocation5 + $0x148] sm:$0xf]
        %v1602 = vld [vmem:[%s6] sm:$0xf]
        %1604 = vset.pattern.permute.xlu0 0
        %1605 = vperm.xlu0 %1604, %v1602
        %v1606 = vpop.permute.xlu0 %1605
        %v1609 = vsel %vm1410, %v1559, 0
        %v1612 = vsel %vm1205, %v1599, 0
        %v1615 = vsel %vm1205, %v1600, 0
        %v1618 = vsel %vm1205, %v1601, 0
        %1620 = vmatprep.subr.mxu0 %v1561
        %1621 = vmatpush1.msra.mxu0 %v1560
        %1622 = vmatprep.subr.mxu0 %v1564
        %1623 = vmatpush1.msra.mxu0 %v1563
        %1624 = vmatprep.subr.mxu0 %v1567
        %1625 = vmatpush1.msra.mxu0 %v1566
        %1626 = vmatprep.subr.mxu0 %v1570
        %1627 = vmatpush1.msra.mxu0 %v1569
        %1628 = vmatprep.subr.mxu0 %v1573
        %1629 = vmatpush1.msra.mxu0 %v1572
        %1630 = vmatprep.subr.mxu0 %v1576
        %1631 = vmatpush1.msra.mxu0 %v1575
        %1632 = vmatprep.subr.mxu0 %v1579
        %1633 = vmatpush1.msra.mxu0 %v1578
        %1634 = vmatprep.subr.mxu0 %v1582
        %1635 = vmatpush1.msra.mxu0 %v1581
        %1636 = vmatprep.subr.mxu0 %v1585
        %1637 = vmatpush1.msra.mxu0 %v1584
        %1638 = vmatprep.subr.mxu0 %v1588
        %1639 = vmatpush1.msra.mxu0 %v1587
        %1640 = vmatprep.subr.mxu0 %v1591
        %1641 = vmatpush1.msra.mxu0 %v1590
        %1642 = vmatprep.subr.mxu0 %v1594
        %1643 = vmatpush1.msra.mxu0 %v1593
        %1644 = vmatprep.subr.mxu0 %v1597
        %1645 = vmatpush1.msra.mxu0 %v1596
        %1646 = vmatprep.subr.mxu0 %v1615
        %1647 = vmatpush1.msra.mxu0 %v1612
        %1648 = vmatprep.subr.mxu0 0.0
        %1649 = vmatpush1.msra.mxu0 0.0
        %1650 = vmatprep.subr.mxu0 0.0
        %1651 = vmatpush1.msra.mxu0 0.0
        %1652 = vmatprep.subr.mxu0 0.0
        %1653 = vmatpush1.msra.mxu0 0.0
        %1654 = vmatprep.subr.mxu0 0.0
        %1655 = vmatpush1.msra.mxu0 0.0
        %1656 = vmatprep.subr.mxu0 0.0
        %1657 = vmatpush1.msra.mxu0 0.0
        %1658 = vmatprep.subr.mxu0 0.0
        %1659 = vmatpush1.msra.mxu0 0.0
        %1660 = vmatprep.subr.mxu0 0.0
        %1661 = vmatpush1.msra.mxu0 0.0
        %1662 = vmatprep.subr.mxu0 0.0
        %1663 = vmatpush1.msra.mxu0 0.0
        %1664 = vmatprep.subr.mxu0 0.0
        %1665 = vmatpush1.msra.mxu0 0.0
        %1666 = vmatprep.subr.mxu0 0.0
        %1667 = vmatpush1.msra.mxu0 0.0
        %1668 = vmatprep.subr.mxu0 0.0
        %1669 = vmatpush1.msra.mxu0 0.0
        %1670 = vmatprep.subr.mxu0 0.0
        %1671 = vmatpush1.msra.mxu0 0.0
        %1672 = vmatprep.subr.mxu0 0.0
        %1673 = vmatpush1.msra.mxu0 0.0
        %1674 = vmatprep.subr.mxu0 0.0
        %1675 = vmatpush1.msra.mxu0 0.0
        %1676 = vmatprep.subr.mxu0 0.0
        %1677 = vmatpush1.msra.mxu0 0.0
        %1678 = vmatprep.subr.mxu0 0.0
        %1679 = vmatpush1.msra.mxu0 0.0
        %1680 = vmatprep.subr.mxu0 0.0
        %1681 = vmatpush1.msra.mxu0 0.0
        %1682 = vmatprep.subr.mxu0 0.0
        %1683 = vmatpush1.msra.mxu0 0.0
        %1684 = vmatprep.mubr.f32.mxu0 0.0
        %1685 = vmatmul.mubr.f32.gmra.mrb[0].mxu0 %v1609
        %v1686 = vpop.f32.mrb[0].mxu0
        %v1687 = vadd.f32 %v1606, %v1686
        %v1688 = vpop.f32.mrb[0].mxu0
        %v1689 = vadd.f32 %v1606, %v1688
        %1690 = vdwg.mxu0
        %1691 = vmatprep.subr.mxu0 0.0
        %1692 = vmatpush1.msra.mxu0 %v1562
        %1693 = vmatprep.subr.mxu0 0.0
        %1694 = vmatpush1.msra.mxu0 %v1565
        %1695 = vmatprep.subr.mxu0 0.0
        %1696 = vmatpush1.msra.mxu0 %v1568
        %1697 = vmatprep.subr.mxu0 0.0
        %1698 = vmatpush1.msra.mxu0 %v1571
        %1699 = vmatprep.subr.mxu0 0.0
        %1700 = vmatpush1.msra.mxu0 %v1574
        %1701 = vmatprep.subr.mxu0 0.0
        %1702 = vmatpush1.msra.mxu0 %v1577
        %1703 = vmatprep.subr.mxu0 0.0
        %1704 = vmatpush1.msra.mxu0 %v1580
        %1705 = vmatprep.subr.mxu0 0.0
        %1706 = vmatpush1.msra.mxu0 %v1583
        %1707 = vmatprep.subr.mxu0 0.0
        %1708 = vmatpush1.msra.mxu0 %v1586
        %1709 = vmatprep.subr.mxu0 0.0
        %1710 = vmatpush1.msra.mxu0 %v1589
        %1711 = vmatprep.subr.mxu0 0.0
        %1712 = vmatpush1.msra.mxu0 %v1592
        %1713 = vmatprep.subr.mxu0 0.0
        %1714 = vmatpush1.msra.mxu0 %v1595
        %1715 = vmatprep.subr.mxu0 0.0
        %1716 = vmatpush1.msra.mxu0 %v1598
        %1717 = vmatprep.subr.mxu0 0.0
        %1718 = vmatpush1.msra.mxu0 %v1618
        %1719 = vmatprep.subr.mxu0 0.0
        %1720 = vmatpush1.msra.mxu0 0.0
        %1721 = vmatprep.subr.mxu0 0.0
        %1722 = vmatpush1.msra.mxu0 0.0
        %1723 = vmatprep.subr.mxu0 0.0
        %1724 = vmatpush1.msra.mxu0 0.0
        %1725 = vmatprep.subr.mxu0 0.0
        %1726 = vmatpush1.msra.mxu0 0.0
        %1727 = vmatprep.subr.mxu0 0.0
        %1728 = vmatpush1.msra.mxu0 0.0
        %1729 = vmatprep.subr.mxu0 0.0
        %1730 = vmatpush1.msra.mxu0 0.0
        %1731 = vmatprep.subr.mxu0 0.0
        %1732 = vmatpush1.msra.mxu0 0.0
        %1733 = vmatprep.subr.mxu0 0.0
        %1734 = vmatpush1.msra.mxu0 0.0
        %1735 = vmatprep.subr.mxu0 0.0
        %1736 = vmatpush1.msra.mxu0 0.0
        %1737 = vmatprep.subr.mxu0 0.0
        %1738 = vmatpush1.msra.mxu0 0.0
        %1739 = vmatprep.subr.mxu0 0.0
        %1740 = vmatpush1.msra.mxu0 0.0
        %1741 = vmatprep.subr.mxu0 0.0
        %1742 = vmatpush1.msra.mxu0 0.0
        %1743 = vmatprep.subr.mxu0 0.0
        %1744 = vmatpush1.msra.mxu0 0.0
        %1745 = vmatprep.subr.mxu0 0.0
        %1746 = vmatpush1.msra.mxu0 0.0
        %1747 = vmatprep.subr.mxu0 0.0
        %1748 = vmatpush1.msra.mxu0 0.0
        %1749 = vmatprep.subr.mxu0 0.0
        %1750 = vmatpush1.msra.mxu0 0.0
        %1751 = vmatprep.subr.mxu0 0.0
        %1752 = vmatpush1.msra.mxu0 0.0
        %1753 = vmatprep.subr.mxu0 0.0
        %1754 = vmatpush1.msra.mxu0 0.0
        %1755 = vmatprep.mubr.f32.mxu0 0.0
        %1756 = vmatmul.mubr.f32.gmra.mrb[0].mxu0 %v1609
        %v1757 = vpop.f32.mrb[0].mxu0
        %v1758 = vadd.f32 %v1606, %v1757
        %v1759 = vpop.f32.mrb[0].mxu0
        %1760 = vdwg.mxu0
        %v1761 = vmax.f32 %v1687, 0.0
        %v1762 = vmax.f32 %v1689, 0.0
        %v1763 = vmax.f32 %v1758, 0.0
        %v1764 = vld [vmem:[%s7] sm:$0x1]
        %vm1765 = vcmask 31744
        %v1767 = vsel %vm1765, %v1764, 0
        %v1770 = vsel %vm1205, %v1761, 0
        %v1773 = vsel %vm1205, %v1762, 0
        %v1776 = vsel %vm1205, %v1763, 0
        %1778 = vmatprep.subr.mxu0 %v1773
        %1779 = vmatpush1.msra.mxu0 %v1770
        %1780 = vmatprep.subr.mxu0 0.0
        %1781 = vmatpush1.msra.mxu0 0.0
        %1782 = vmatprep.subr.mxu0 0.0
        %1783 = vmatpush1.msra.mxu0 0.0
        %1784 = vmatprep.subr.mxu0 0.0
        %1785 = vmatpush1.msra.mxu0 0.0
        %1786 = vmatprep.subr.mxu0 0.0
        %1787 = vmatpush1.msra.mxu0 0.0
        %1788 = vmatprep.subr.mxu0 0.0
        %1789 = vmatpush1.msra.mxu0 0.0
        %1790 = vmatprep.subr.mxu0 0.0
        %1791 = vmatpush1.msra.mxu0 0.0
        %1792 = vmatprep.subr.mxu0 0.0
        %1793 = vmatpush1.msra.mxu0 0.0
        %1794 = vmatprep.subr.mxu0 0.0
        %1795 = vmatpush1.msra.mxu0 0.0
        %1796 = vmatprep.subr.mxu0 0.0
        %1797 = vmatpush1.msra.mxu0 0.0
        %1798 = vmatprep.subr.mxu0 0.0
        %1799 = vmatpush1.msra.mxu0 0.0
        %1800 = vmatprep.subr.mxu0 0.0
        %1801 = vmatpush1.msra.mxu0 0.0
        %1802 = vmatprep.subr.mxu0 0.0
        %1803 = vmatpush1.msra.mxu0 0.0
        %1804 = vmatprep.subr.mxu0 0.0
        %1805 = vmatpush1.msra.mxu0 0.0
        %1806 = vmatprep.subr.mxu0 0.0
        %1807 = vmatpush1.msra.mxu0 0.0
        %1808 = vmatprep.subr.mxu0 0.0
        %1809 = vmatpush1.msra.mxu0 0.0
        %1810 = vmatprep.subr.mxu0 0.0
        %1811 = vmatpush1.msra.mxu0 0.0
        %1812 = vmatprep.subr.mxu0 0.0
        %1813 = vmatpush1.msra.mxu0 0.0
        %1814 = vmatprep.subr.mxu0 0.0
        %1815 = vmatpush1.msra.mxu0 0.0
        %1816 = vmatprep.subr.mxu0 0.0
        %1817 = vmatpush1.msra.mxu0 0.0
        %1818 = vmatprep.subr.mxu0 0.0
        %1819 = vmatpush1.msra.mxu0 0.0
        %1820 = vmatprep.subr.mxu0 0.0
        %1821 = vmatpush1.msra.mxu0 0.0
        %1822 = vmatprep.subr.mxu0 0.0
        %1823 = vmatpush1.msra.mxu0 0.0
        %1824 = vmatprep.subr.mxu0 0.0
        %1825 = vmatpush1.msra.mxu0 0.0
        %1826 = vmatprep.subr.mxu0 0.0
        %1827 = vmatpush1.msra.mxu0 0.0
        %1828 = vmatprep.subr.mxu0 0.0
        %1829 = vmatpush1.msra.mxu0 0.0
        %1830 = vmatprep.subr.mxu0 0.0
        %1831 = vmatpush1.msra.mxu0 0.0
        %1832 = vmatprep.subr.mxu0 0.0
        %1833 = vmatpush1.msra.mxu0 0.0
        %1834 = vmatprep.subr.mxu0 0.0
        %1835 = vmatpush1.msra.mxu0 0.0
        %1836 = vmatprep.subr.mxu0 0.0
        %1837 = vmatpush1.msra.mxu0 0.0
        %1838 = vmatprep.subr.mxu0 0.0
        %1839 = vmatpush1.msra.mxu0 0.0
        %1840 = vmatprep.subr.mxu0 0.0
        %1841 = vmatpush1.msra.mxu0 0.0
        %1842 = vmatprep.mubr.f32.mxu0 0.0
        %1843 = vmatmul.mubr.f32.gmra.mrb[0].mxu0 %v1767
        %v1844 = vpop.f32.mrb[0].mxu0
        %v1845 = vadd.f32 0.0, %v1844
        %v1846 = vpop.f32.mrb[0].mxu0
        %v1847 = vadd.f32 0.0, %v1846
        %1848 = vdwg.mxu0
        %1849 = vmatprep.subr.mxu0 0.0
        %1850 = vmatpush1.msra.mxu0 %v1776
        %1851 = vmatprep.subr.mxu0 0.0
        %1852 = vmatpush1.msra.mxu0 0.0
        %1853 = vmatprep.subr.mxu0 0.0
        %1854 = vmatpush1.msra.mxu0 0.0
        %1855 = vmatprep.subr.mxu0 0.0
        %1856 = vmatpush1.msra.mxu0 0.0
        %1857 = vmatprep.subr.mxu0 0.0
        %1858 = vmatpush1.msra.mxu0 0.0
        %1859 = vmatprep.subr.mxu0 0.0
        %1860 = vmatpush1.msra.mxu0 0.0
        %1861 = vmatprep.subr.mxu0 0.0
        %1862 = vmatpush1.msra.mxu0 0.0
        %1863 = vmatprep.subr.mxu0 0.0
        %1864 = vmatpush1.msra.mxu0 0.0
        %1865 = vmatprep.subr.mxu0 0.0
        %1866 = vmatpush1.msra.mxu0 0.0
        %1867 = vmatprep.subr.mxu0 0.0
        %1868 = vmatpush1.msra.mxu0 0.0
        %1869 = vmatprep.subr.mxu0 0.0
        %1870 = vmatpush1.msra.mxu0 0.0
        %1871 = vmatprep.subr.mxu0 0.0
        %1872 = vmatpush1.msra.mxu0 0.0
        %1873 = vmatprep.subr.mxu0 0.0
        %1874 = vmatpush1.msra.mxu0 0.0
        %1875 = vmatprep.subr.mxu0 0.0
        %1876 = vmatpush1.msra.mxu0 0.0
        %1877 = vmatprep.subr.mxu0 0.0
        %1878 = vmatpush1.msra.mxu0 0.0
        %1879 = vmatprep.subr.mxu0 0.0
        %1880 = vmatpush1.msra.mxu0 0.0
        %1881 = vmatprep.subr.mxu0 0.0
        %1882 = vmatpush1.msra.mxu0 0.0
        %1883 = vmatprep.subr.mxu0 0.0
        %1884 = vmatpush1.msra.mxu0 0.0
        %1885 = vmatprep.subr.mxu0 0.0
        %1886 = vmatpush1.msra.mxu0 0.0
        %1887 = vmatprep.subr.mxu0 0.0
        %1888 = vmatpush1.msra.mxu0 0.0
        %1889 = vmatprep.subr.mxu0 0.0
        %1890 = vmatpush1.msra.mxu0 0.0
        %1891 = vmatprep.subr.mxu0 0.0
        %1892 = vmatpush1.msra.mxu0 0.0
        %1893 = vmatprep.subr.mxu0 0.0
        %1894 = vmatpush1.msra.mxu0 0.0
        %1895 = vmatprep.subr.mxu0 0.0
        %1896 = vmatpush1.msra.mxu0 0.0
        %1897 = vmatprep.subr.mxu0 0.0
        %1898 = vmatpush1.msra.mxu0 0.0
        %1899 = vmatprep.subr.mxu0 0.0
        %1900 = vmatpush1.msra.mxu0 0.0
        %1901 = vmatprep.subr.mxu0 0.0
        %1902 = vmatpush1.msra.mxu0 0.0
        %1903 = vmatprep.subr.mxu0 0.0
        %1904 = vmatpush1.msra.mxu0 0.0
        %1905 = vmatprep.subr.mxu0 0.0
        %1906 = vmatpush1.msra.mxu0 0.0
        %1907 = vmatprep.subr.mxu0 0.0
        %1908 = vmatpush1.msra.mxu0 0.0
        %1909 = vmatprep.subr.mxu0 0.0
        %1910 = vmatpush1.msra.mxu0 0.0
        %1911 = vmatprep.subr.mxu0 0.0
        %1912 = vmatpush1.msra.mxu0 0.0
        %1913 = vmatprep.mubr.f32.mxu0 0.0
        %1914 = vmatmul.mubr.f32.gmra.mrb[0].mxu0 %v1767
        %v1915 = vpop.f32.mrb[0].mxu0
        %v1916 = vadd.f32 0.0, %v1915
        %v1917 = vpop.f32.mrb[0].mxu0
        %1918 = vdwg.mxu0
        %v1919 = vld [vmem:[%s11] sm:$0xff]
        %v1920 = vld [vmem:[%s11 + $0x8] sm:$0xff]
        %v1921 = vld [vmem:[%s11 + $0x10] sm:$0xff]
        %v1922 = vld [vmem:[%s11 + $0x18] sm:$0xff]
        %v1923 = vld [vmem:[%s11 + $0x20] sm:$0xff]
        %v1924 = vld [vmem:[%s11 + $0x28] sm:$0xff]
        %v1925 = vld [vmem:[%s11 + $0x30] sm:$0xff]
        %v1926 = vld [vmem:[%s11 + $0x38] sm:$0xff]
        %v1927 = vld [vmem:[%s11 + $0x40] sm:$0xff]
        %v1928 = vld [vmem:[%s11 + $0x48] sm:$0xff]
        %v1929 = vld [vmem:[%s11 + $0x50] sm:$0xff]
        %v1930 = vld [vmem:[%s11 + $0x58] sm:$0xff]
        %v1931 = vld [vmem:[%s11 + $0x60] sm:$0xff]
        %v1932 = vld [vmem:[%s11 + $0x68] sm:$0xff]
        %v1933 = vld [vmem:[%s11 + $0x70] sm:$0xff]
        %v1934 = vld [vmem:[%s11 + $0x78] sm:$0xff]
        %v1935 = vld [vmem:[%s11 + $0x80] sm:$0xff]
        %v1936 = vld [vmem:[%s11 + $0x88] sm:$0xff]
        %v1937 = vld [vmem:[%s11 + $0x90] sm:$0xff]
        %v1938 = vld [vmem:[%s11 + $0x98] sm:$0xff]
        %v1939 = vld [vmem:[%s11 + $0xa0] sm:$0xff]
        %v1940 = vld [vmem:[%s11 + $0xa8] sm:$0xff]
        %v1941 = vld [vmem:[%s11 + $0xb0] sm:$0xff]
        %v1942 = vld [vmem:[%s11 + $0xb8] sm:$0xff]
        %v1943 = vld [vmem:[%s11 + $0xc0] sm:$0xff]
        %v1944 = vld [vmem:[%s11 + $0xc8] sm:$0xff]
        %v1945 = vld [vmem:[%s11 + $0xd0] sm:$0xff]
        %v1946 = vld [vmem:[%s11 + $0xd8] sm:$0xff]
        %v1947 = vld [vmem:[%s11 + $0xe0] sm:$0xff]
        %v1948 = vld [vmem:[%s11 + $0xe8] sm:$0xff]
        %v1949 = vld [vmem:[%s11 + $0xf0] sm:$0xff]
        %v1950 = vld [vmem:[%s11 + $0xf8] sm:$0xff]
        %v1951 = vld [vmem:[%s11 + $0x100] sm:$0xff]
        %v1952 = vld [vmem:[%s11 + $0x108] sm:$0xff]
        %v1953 = vld [vmem:[%s11 + $0x110] sm:$0xff]
        %v1954 = vld [vmem:[%s11 + $0x118] sm:$0xff]
        %v1955 = vld [vmem:[%s11 + $0x120] sm:$0xff]
        %v1956 = vld [vmem:[%s11 + $0x128] sm:$0xff]
        %v1957 = vld [vmem:[%s11 + $0x130] sm:$0xff]
        %v1958 = vld [vmem:[%s11 + $0x138] sm:$0xff]
        %v1959 = vld [vmem:[%s11 + $0x140] sm:$0xff]
        %v1960 = vld [vmem:[%s11 + $0x148] sm:$0xff]
        %v1961 = vld [vmem:[%s11 + $0x150] sm:$0xff]
        %v1962 = vld [vmem:[%s11 + $0x158] sm:$0xff]
        %v1963 = vld [vmem:[%s11 + $0x160] sm:$0xff]
        %v1964 = vld [vmem:[%s11 + $0x168] sm:$0xff]
        %v1965 = vld [vmem:[%s11 + $0x170] sm:$0xff]
        %v1966 = vld [vmem:[%s11 + $0x178] sm:$0xff]
        %v1967 = vld [vmem:[%s11 + $0x180] sm:$0xff]
        %v1968 = vld [vmem:[%s11 + $0x188] sm:$0xff]
        %v1969 = vld [vmem:[%s11 + $0x190] sm:$0xff]
        %v1970 = vld [vmem:[%s11 + $0x198] sm:$0xff]
        %v1971 = vld [vmem:[%s11 + $0x1a0] sm:$0xff]
        %v1972 = vld [vmem:[%s11 + $0x1a8] sm:$0xff]
        %v1973 = vld [vmem:[%s11 + $0x1b0] sm:$0xff]
        %v1974 = vld [vmem:[%s11 + $0x1b8] sm:$0xff]
        %v1975 = vld [vmem:[%s11 + $0x1c0] sm:$0xff]
        %v1976 = vld [vmem:[%s11 + $0x1c8] sm:$0xff]
        %v1977 = vld [vmem:[%s11 + $0x1d0] sm:$0xff]
        %v1978 = vld [vmem:[%s11 + $0x1d8] sm:$0xff]
        %v1979 = vld [vmem:[%s11 + $0x1e0] sm:$0xff]
        %v1980 = vld [vmem:[%s11 + $0x1e8] sm:$0xff]
        %v1981 = vld [vmem:[%s11 + $0x1f0] sm:$0xff]
        %v1982 = vld [vmem:[%s11 + $0x1f8] sm:$0xff]
        %v1983 = vld [vmem:[%s11 + $0x200] sm:$0xff]
        %v1984 = vld [vmem:[%s11 + $0x208] sm:$0xff]
        %v1985 = vld [vmem:[%s11 + $0x210] sm:$0xff]
        %v1986 = vld [vmem:[%s11 + $0x218] sm:$0xff]
        %v1987 = vld [vmem:[%s11 + $0x220] sm:$0xff]
        %v1988 = vld [vmem:[%s11 + $0x228] sm:$0xff]
        %v1989 = vld [vmem:[%s11 + $0x230] sm:$0xff]
        %v1990 = vld [vmem:[%s11 + $0x238] sm:$0xff]
        %v1992 = vsel %vm1187, %v1916, 0
        %1994 = vmatprep.subr.mxu0 %v1920
        %1995 = vmatpush1.msra.mxu0 %v1919
        %1996 = vmatprep.subr.mxu0 %v1922
        %1997 = vmatpush1.msra.mxu0 %v1921
        %1998 = vmatprep.subr.mxu0 %v1924
        %1999 = vmatpush1.msra.mxu0 %v1923
        %2000 = vmatprep.subr.mxu0 %v1926
        %2001 = vmatpush1.msra.mxu0 %v1925
        %2002 = vmatprep.subr.mxu0 %v1928
        %2003 = vmatpush1.msra.mxu0 %v1927
        %2004 = vmatprep.subr.mxu0 %v1930
        %2005 = vmatpush1.msra.mxu0 %v1929
        %2006 = vmatprep.subr.mxu0 %v1932
        %2007 = vmatpush1.msra.mxu0 %v1931
        %2008 = vmatprep.subr.mxu0 %v1934
        %2009 = vmatpush1.msra.mxu0 %v1933
        %2010 = vmatprep.subr.mxu0 %v1936
        %2011 = vmatpush1.msra.mxu0 %v1935
        %2012 = vmatprep.subr.mxu0 %v1938
        %2013 = vmatpush1.msra.mxu0 %v1937
        %2014 = vmatprep.subr.mxu0 %v1940
        %2015 = vmatpush1.msra.mxu0 %v1939
        %2016 = vmatprep.subr.mxu0 %v1942
        %2017 = vmatpush1.msra.mxu0 %v1941
        %2018 = vmatprep.subr.mxu0 %v1944
        %2019 = vmatpush1.msra.mxu0 %v1943
        %2020 = vmatprep.subr.mxu0 %v1946
        %2021 = vmatpush1.msra.mxu0 %v1945
        %2022 = vmatprep.subr.mxu0 %v1948
        %2023 = vmatpush1.msra.mxu0 %v1947
        %2024 = vmatprep.subr.mxu0 %v1950
        %2025 = vmatpush1.msra.mxu0 %v1949
        %2026 = vmatprep.subr.mxu0 %v1952
        %2027 = vmatpush1.msra.mxu0 %v1951
        %2028 = vmatprep.subr.mxu0 %v1954
        %2029 = vmatpush1.msra.mxu0 %v1953
        %2030 = vmatprep.subr.mxu0 %v1956
        %2031 = vmatpush1.msra.mxu0 %v1955
        %2032 = vmatprep.subr.mxu0 %v1958
        %2033 = vmatpush1.msra.mxu0 %v1957
        %2034 = vmatprep.subr.mxu0 %v1960
        %2035 = vmatpush1.msra.mxu0 %v1959
        %2036 = vmatprep.subr.mxu0 %v1962
        %2037 = vmatpush1.msra.mxu0 %v1961
        %2038 = vmatprep.subr.mxu0 %v1964
        %2039 = vmatpush1.msra.mxu0 %v1963
        %2040 = vmatprep.subr.mxu0 %v1966
        %2041 = vmatpush1.msra.mxu0 %v1965
        %2042 = vmatprep.subr.mxu0 %v1968
        %2043 = vmatpush1.msra.mxu0 %v1967
        %2044 = vmatprep.subr.mxu0 %v1970
        %2045 = vmatpush1.msra.mxu0 %v1969
        %2046 = vmatprep.subr.mxu0 %v1972
        %2047 = vmatpush1.msra.mxu0 %v1971
        %2048 = vmatprep.subr.mxu0 %v1974
        %2049 = vmatpush1.msra.mxu0 %v1973
        %2050 = vmatprep.subr.mxu0 %v1976
        %2051 = vmatpush1.msra.mxu0 %v1975
        %2052 = vmatprep.subr.mxu0 %v1978
        %2053 = vmatpush1.msra.mxu0 %v1977
        %2054 = vmatprep.subr.mxu0 %v1980
        %2055 = vmatpush1.msra.mxu0 %v1979
        %2056 = vmatprep.subr.mxu0 %v1982
        %2057 = vmatpush1.msra.mxu0 %v1981
        %2058 = vmatprep.mubr.f32.mxu0 %v1847
        %2059 = vmatmul.mubr.f32.gmra.mrb[0].mxu0 %v1845
        %v2060 = vpop.f32.mrb[0].mxu0
        %v2061 = vadd.f32 0.0, %v2060
        %v2062 = vpop.f32.mrb[0].mxu0
        %v2063 = vadd.f32 0.0, %v2062
        %2064 = vdwg.mxu0
        %2065 = vmatprep.subr.mxu0 %v1984
        %2066 = vmatpush1.msra.mxu0 %v1983
        %2067 = vmatprep.subr.mxu0 %v1986
        %2068 = vmatpush1.msra.mxu0 %v1985
        %2069 = vmatprep.subr.mxu0 %v1988
        %2070 = vmatpush1.msra.mxu0 %v1987
        %2071 = vmatprep.subr.mxu0 %v1990
        %2072 = vmatpush1.msra.mxu0 %v1989
        %2073 = vmatprep.subr.mxu0 0.0
        %2074 = vmatpush1.msra.mxu0 0.0
        %2075 = vmatprep.subr.mxu0 0.0
        %2076 = vmatpush1.msra.mxu0 0.0
        %2077 = vmatprep.subr.mxu0 0.0
        %2078 = vmatpush1.msra.mxu0 0.0
        %2079 = vmatprep.subr.mxu0 0.0
        %2080 = vmatpush1.msra.mxu0 0.0
        %2081 = vmatprep.subr.mxu0 0.0
        %2082 = vmatpush1.msra.mxu0 0.0
        %2083 = vmatprep.subr.mxu0 0.0
        %2084 = vmatpush1.msra.mxu0 0.0
        %2085 = vmatprep.subr.mxu0 0.0
        %2086 = vmatpush1.msra.mxu0 0.0
        %2087 = vmatprep.subr.mxu0 0.0
        %2088 = vmatpush1.msra.mxu0 0.0
        %2089 = vmatprep.subr.mxu0 0.0
        %2090 = vmatpush1.msra.mxu0 0.0
        %2091 = vmatprep.subr.mxu0 0.0
        %2092 = vmatpush1.msra.mxu0 0.0
        %2093 = vmatprep.subr.mxu0 0.0
        %2094 = vmatpush1.msra.mxu0 0.0
        %2095 = vmatprep.subr.mxu0 0.0
        %2096 = vmatpush1.msra.mxu0 0.0
        %2097 = vmatprep.subr.mxu0 0.0
        %2098 = vmatpush1.msra.mxu0 0.0
        %2099 = vmatprep.subr.mxu0 0.0
        %2100 = vmatpush1.msra.mxu0 0.0
        %2101 = vmatprep.subr.mxu0 0.0
        %2102 = vmatpush1.msra.mxu0 0.0
        %2103 = vmatprep.subr.mxu0 0.0
        %2104 = vmatpush1.msra.mxu0 0.0
        %2105 = vmatprep.subr.mxu0 0.0
        %2106 = vmatpush1.msra.mxu0 0.0
        %2107 = vmatprep.subr.mxu0 0.0
        %2108 = vmatpush1.msra.mxu0 0.0
        %2109 = vmatprep.subr.mxu0 0.0
        %2110 = vmatpush1.msra.mxu0 0.0
        %2111 = vmatprep.subr.mxu0 0.0
        %2112 = vmatpush1.msra.mxu0 0.0
        %2113 = vmatprep.subr.mxu0 0.0
        %2114 = vmatpush1.msra.mxu0 0.0
        %2115 = vmatprep.subr.mxu0 0.0
        %2116 = vmatpush1.msra.mxu0 0.0
        %2117 = vmatprep.subr.mxu0 0.0
        %2118 = vmatpush1.msra.mxu0 0.0
        %2119 = vmatprep.subr.mxu0 0.0
        %2120 = vmatpush1.msra.mxu0 0.0
        %2121 = vmatprep.subr.mxu0 0.0
        %2122 = vmatpush1.msra.mxu0 0.0
        %2123 = vmatprep.subr.mxu0 0.0
        %2124 = vmatpush1.msra.mxu0 0.0
        %2125 = vmatprep.subr.mxu0 0.0
        %2126 = vmatpush1.msra.mxu0 0.0
        %2127 = vmatprep.subr.mxu0 0.0
        %2128 = vmatpush1.msra.mxu0 0.0
        %2129 = vmatprep.mubr.f32.mxu0 0.0
        %2130 = vmatmul.mubr.f32.gmra.mrb[0].mxu0 %v1992
        %v2131 = vpop.f32.mrb[0].mxu0
        %v2132 = vadd.f32 %v2061, %v2131
        %v2133 = vpop.f32.mrb[0].mxu0
        %v2134 = vadd.f32 %v2063, %v2133
        %2135 = vdwg.mxu0
        %v2138 = vcombine.low %v2132, %v2134
        %v2140 = vunpack.c.l.s4 1966171168
        %v2141 = vunpack.c.0.s8 %v2140
        %v2142 = vlaneseq
        %v2143 = vshrl.u32 %v2142, 7
        %v2144 = vsub.s32 %v2141, %v2143
        %v2145 = vrot.slane %v2138, %v2144
        %v2147 = vunpack.c.l.s4 1966171168
        %v2148 = vunpack.c.0.s8 %v2147
        %v2149 = vlaneseq
        %v2150 = vshrl.u32 %v2149, 7
        %v2151 = vsub.s32 %v2148, %v2150
        %v2152 = vrot.slane %v2145, %v2151
        %v2154 = vlaneseq
        %vm2155 = vcmp.ge.s32.totalorder %v2154, 0
        %vm2156 = vcmp.lt.s32.totalorder %v2154, 256
        %vm2157 = vmand %vm2155, %vm2156
        %2158 = vst.msk [vmem:[%s432] sm:$0x3] %vm2157, %v2152
        %s2159 = sand.u32 %s301, 1
        %s2160 = scalar_lea.sflag [#allocation7], %s2159
        %s2161 = sand.u32 %s301, 1
        %s2162 = smul.addr %s2161, 2
        %s2163 = scalar_lea.vmem [#allocation6], %s2162
        // Predicated region
        $region69: #{tpu_custom_call.1} parent=67 // pred_check
          %p2164 = pneg %p311
        $region70: #{tpu_custom_call.1} parent=67 // pred_check_branch
          %2166 = sbr.rel (%p2164) target = $region72
        $region71: #{tpu_custom_call.1} parent=67 // pred_region
          %s2168 = ssub.s32 32, 32
          %2169 = vsyncadd %s2160, %s2168
          %s2170 = smul.addr %s26, 2
          %s2171 = smul.addr %s2170, 16
          %s2172 = scalar_lea.hbm %s12, %s2171
          %s2174 = sshll.u32 %s2163, 4
          %s2175 = int_to_ptr.vmem [resolvable:$true] %s2174
          %2177 = dma.vmem_to_hbm [thread:$0]  %s2175, 32, %s2172, %s2160
        $region72: #{tpu_custom_call.1} parent=67 // pred_fallthru
          _
      $region68: #{tpu_custom_call.1} parent=5 // pred_fallthru
        _
      %p2178 = scmp.le.s32.totalorder 2, %s21
      // Predicated region
      $region73: #{tpu_custom_call.1} parent=5 // pred_check
        %p2179 = pneg %p2178
      $region74: #{tpu_custom_call.1} parent=5 // pred_check_branch
        %2181 = sbr.rel (%p2179) target = $region76
      $region75: #{tpu_custom_call.1} parent=5 // pred_region
        %s2182 = ssub.s32 %s21, 2
        // Predicated region
        $region77: #{tpu_custom_call.1} parent=75 // pred_check
          %p2183 = pneg %p317
        $region78: #{tpu_custom_call.1} parent=75 // pred_check_branch
          %2185 = sbr.rel (%p2183) target = $region80
        $region79: #{tpu_custom_call.1} parent=75 // pred_region
          %s2186 = sand.u32 %s302, 1
          %s2187 = scalar_lea.sflag [#allocation7], %s2186
          %s2188 = sand.u32 %s302, 1
          %s2189 = smul.addr %s2188, 2
          %s2190 = scalar_lea.vmem [#allocation6], %s2189
          %2191 = dma.done %s2187, 32
        $region80: #{tpu_custom_call.1} parent=75 // pred_fallthru
          _
      $region76: #{tpu_custom_call.1} parent=5 // pred_fallthru
        _
    $region6: #{tpu_custom_call.1} parent=1 // loop_footer
      %s25 = sadd.s32 1, %s21
    $region7: #{tpu_custom_call.1} parent=1 // loop_footer_branch
      %20 = sbr.rel target = $region3
    $region8: #{tpu_custom_call.1} parent=1 // loop_exit
      _
    %2192 = vsyncpa [#allocation7], 1
    %s2193 = scalar_lea.sflag [#allocation7], 1
    %2194 = vsyncpa %s2193, 1

</llo_original>
